<compile_context>
chip_gen: v5e
topology: v5e:2x2
jax: 0.10.0
libtpu: 0.0.40
codegen_flags: <defaults>
</compile_context>

<pallas_src>
import functools

import jax
import jax.numpy as jnp
from jax.experimental import pallas as pl
from jax.experimental.pallas import tpu as pltpu


def _layernorm(y, w, b, eps=1e-5):
    mu = jnp.mean(y, axis=-1, keepdims=True)
    var = jnp.mean((y - mu) ** 2, axis=-1, keepdims=True)
    return (y - mu) * jax.lax.rsqrt(var + eps) * w + b


def _pick_divisor_tile(n, pref):
    """Largest tile <= pref that divides n (falls back to n)."""
    if n <= pref:
        return n
    for t in range(pref, 7, -1):
        if n % t == 0:
            return t
    return n


def _flash_mha(q, k, v, *, q_tile, kv_chunk):
    """Online-softmax attention.  q, k, v: (BH, S, dh) bf16 -> (BH, S, dh) f32."""
    BH, S, dh = q.shape
    out_tiles = []
    for qs in range(0, S, q_tile):           # trace-time loops (1x1 at demo size)
        qt = q[:, qs:qs + q_tile, :]
        m = jnp.full((BH, q_tile, 1), -jnp.inf, jnp.float32)
        l = jnp.zeros((BH, q_tile, 1), jnp.float32)
        acc = jnp.zeros((BH, q_tile, dh), jnp.float32)
        for ks in range(0, S, kv_chunk):
            kc = k[:, ks:ks + kv_chunk, :]
            vc = v[:, ks:ks + kv_chunk, :]
            s = jnp.einsum("hqd,hkd->hqk", qt, kc,
                           preferred_element_type=jnp.float32)
            m_new = jnp.maximum(m, jnp.max(s, axis=-1, keepdims=True))
            alpha = jnp.exp(m - m_new)
            p = jnp.exp(s - m_new)
            l = alpha * l + jnp.sum(p, axis=-1, keepdims=True)
            acc = alpha * acc + jnp.einsum("hqk,hkd->hqd", p.astype(v.dtype), vc,
                                           preferred_element_type=jnp.float32)
            m = m_new
        out_tiles.append(acc * pl.reciprocal(l, approx=True))
    if len(out_tiles) == 1:
        return out_tiles[0]
    return jnp.concatenate(out_tiles, axis=1)


def transformer_block_kernel(
    x_ref,      # (Bblk, S, D)  input batch chunk
    wqkv_ref,   # (D, 3D)  bf16, in_proj weight pre-transposed, Q cols pre-scaled
    wo_ref,     # (D, D)   bf16, out_proj weight pre-transposed
    w1_ref,     # (D, DFF) bf16, linear1 pre-transposed
    w2_ref,     # (DFF, D) bf16, linear2 pre-transposed
    small_ref,  # (8, P)   f32 packed: bqkv, bo, ln1_w, ln1_b, b1, b2, ln2_w, ln2_b
    o_ref,      # (Bblk, S, D)
    h_ref,      # VMEM scratch (Bblk, S, D) f32: residual carried across layers
    *,
    nhead,
    dff,
    activation,
    q_tile,
    kv_chunk,
):
    layer = pl.program_id(1)
    num_layers = pl.num_programs(1)

    Bb, S, D = x_ref.shape
    H = nhead
    dh = D // H
    M = Bb * S

    # First layer of this batch chunk: load the input into the carried state.
    @pl.when(layer == 0)
    def _():
        h_ref[...] = x_ref[...].astype(jnp.float32)

    x = h_ref[...].reshape(M, D)                    # (M, D) f32

    sm = small_ref[...]                             # (8, P) f32
    bqkv = sm[0:1, :3 * D]
    bo = sm[1:2, :D]
    ln1_w = sm[2:3, :D]
    ln1_b = sm[3:4, :D]
    b1 = sm[4:5, :dff]
    b2 = sm[5:6, :D]
    ln2_w = sm[6:7, :D]
    ln2_b = sm[7:8, :D]

    # ---- multi-head self attention --------------------------------------
    qkv = jnp.dot(x.astype(jnp.bfloat16), wqkv_ref[...],
                  preferred_element_type=jnp.float32) + bqkv      # (M, 3D) f32

    def split_heads(t):  # (M, D) -> (H*Bb, S, dh)
        t = jnp.transpose(t.reshape(M, H, dh), (1, 0, 2))          # (H, M, dh)
        return t.reshape(H * Bb, S, dh)

    q = split_heads(qkv[:, :D].astype(jnp.bfloat16))               # scale pre-folded
    k = split_heads(qkv[:, D:2 * D].astype(jnp.bfloat16))
    v = split_heads(qkv[:, 2 * D:].astype(jnp.bfloat16))

    ctx = _flash_mha(q, k, v, q_tile=q_tile, kv_chunk=kv_chunk)    # (H*Bb, S, dh) f32
    ctx = jnp.transpose(ctx.reshape(H, M, dh), (1, 0, 2)).reshape(M, D)

    attn = jnp.dot(ctx.astype(jnp.bfloat16), wo_ref[...],
                   preferred_element_type=jnp.float32) + bo        # (M, D) f32

    x = _layernorm(x + attn, ln1_w, ln1_b)

    # ---- feed-forward -----------------------------------------------------
    h1 = jnp.dot(x.astype(jnp.bfloat16), w1_ref[...],
                 preferred_element_type=jnp.float32) + b1          # (M, DFF) f32
    if activation == "relu":
        h1 = jnp.maximum(h1, 0.0)
    else:  # 'gelu' — exact erf, matching torch F.gelu default
        h1 = jax.nn.gelu(h1, approximate=False)
    ff = jnp.dot(h1.astype(jnp.bfloat16), w2_ref[...],
                 preferred_element_type=jnp.float32) + b2          # (M, D) f32

    x = _layernorm(x + ff, ln2_w, ln2_b)

    # Carry to next layer, or emit on the last layer (no redundant store+reload).
    @pl.when(layer < num_layers - 1)
    def _():
        h_ref[...] = x.reshape(Bb, S, D)

    @pl.when(layer == num_layers - 1)
    def _():
        o_ref[...] = x.reshape(Bb, S, D).astype(o_ref.dtype)


def transformer_block(x, params, *, nhead, activation, batch_block=None,
                      vmem_limit_bytes=None):
    """x: (B, S, D). params: layer-stacked, host-pre-transposed tensors."""
    B, S, D = x.shape
    L = params["wqkv_t"].shape[0]
    DFF = params["w1_t"].shape[-1]
    P = params["small"].shape[-1]

    # Batch chunk: amortize weight DMA over many tokens, cap residual scratch ~4 MiB.
    if batch_block is None:
        bb = min(B, max(1, (4 << 20) // (S * D * 4)))
        while B % bb:
            bb -= 1
    else:
        bb = batch_block
    assert B % bb == 0, "batch_block must divide B"

    q_tile = _pick_divisor_tile(S, 256)
    kv_chunk = _pick_divisor_tile(S, 512)

    big = [params["wqkv_t"], params["wo_t"], params["w1_t"], params["w2_t"]]

    def wspec(a):  # per-layer weight block, leading L dim squeezed
        return pl.BlockSpec((None,) + a.shape[1:], lambda b, l: (l, 0, 0))

    in_specs = [pl.BlockSpec((bb, S, D), lambda b, l: (b, 0, 0))]
    in_specs += [wspec(a) for a in big]
    in_specs += [pl.BlockSpec((None, 8, P), lambda b, l: (l, 0, 0))]

    if vmem_limit_bytes is None:
        w_bytes = 2 * (D * 3 * D + D * D + 2 * D * DFF)            # bf16 / layer
        sm_bytes = 8 * P * 4
        io_bytes = bb * S * D * x.dtype.itemsize
        est = 2 * (w_bytes + sm_bytes + 2 * io_bytes) + bb * S * D * 4 + (8 << 20)
        vmem_limit_bytes = max(32 << 20, est)

    kernel = functools.partial(
        transformer_block_kernel, nhead=nhead, dff=DFF, activation=activation,
        q_tile=q_tile, kv_chunk=kv_chunk)

    return pl.pallas_call(
        kernel,
        out_shape=jax.ShapeDtypeStruct((B, S, D), x.dtype),
        grid_spec=pltpu.PrefetchScalarGridSpec(
            num_scalar_prefetch=0,
            grid=(B // bb, L),               # batch chunks outer, layers inner
            in_specs=in_specs,
            out_specs=pl.BlockSpec((bb, S, D), lambda b, l: (b, 0, 0)),
            scratch_shapes=[pltpu.VMEM((bb, S, D), jnp.float32)],
        ),
        compiler_params=pltpu.CompilerParams(
            dimension_semantics=("parallel", "arbitrary"),
            vmem_limit_bytes=vmem_limit_bytes,
        ),
    )(x, *big, params["small"])


def init_params(key, d_model, nhead, dff, num_layers):
    """Layer-stacked parameters: big weights pre-transposed + bf16, Q scale folded,
    small tensors packed into one (L, 8, P) f32 array."""
    D, DFF = d_model, dff
    dh = D // nhead
    scale = 1.0 / float(dh) ** 0.5
    P = max(3 * D, DFF)
    wqkv_l, wo_l, w1_l, w2_l, small_l = [], [], [], [], []
    for _ in range(num_layers):
        key, k0, k1, k2, k3, k4, k5 = jax.random.split(key, 7)
        # PyTorch-convention (out_features, in_features) weights.
        wqkv = 0.05 * jax.random.normal(k0, (3 * D, D), jnp.float32)
        bqkv = 0.05 * jax.random.normal(k4, (3 * D,), jnp.float32)
        wo = 0.05 * jax.random.normal(k1, (D, D), jnp.float32)
        bo = 0.05 * jax.random.normal(k5, (D,), jnp.float32)
        w1 = 0.05 * jax.random.normal(k2, (DFF, D), jnp.float32)
        w2 = 0.05 * jax.random.normal(k3, (D, DFF), jnp.float32)

        # Fold the 1/sqrt(dh) attention scale into the Q projection (+ bias).
        wqkv = wqkv.at[:D, :].multiply(scale)
        bqkv = bqkv.at[:D].multiply(scale)

        wqkv_l.append(jnp.transpose(wqkv).astype(jnp.bfloat16))    # (D, 3D)
        wo_l.append(jnp.transpose(wo).astype(jnp.bfloat16))        # (D, D)
        w1_l.append(jnp.transpose(w1).astype(jnp.bfloat16))        # (D, DFF)
        w2_l.append(jnp.transpose(w2).astype(jnp.bfloat16))        # (DFF, D)

        sm = jnp.zeros((8, P), jnp.float32)
        sm = sm.at[0, :3 * D].set(bqkv)
        sm = sm.at[1, :D].set(bo)
        sm = sm.at[2, :D].set(jnp.ones((D,), jnp.float32))   # ln1_w
        sm = sm.at[3, :D].set(jnp.zeros((D,), jnp.float32))  # ln1_b
        sm = sm.at[4, :DFF].set(jnp.zeros((DFF,), jnp.float32))  # b1
        sm = sm.at[5, :D].set(jnp.zeros((D,), jnp.float32))  # b2
        sm = sm.at[6, :D].set(jnp.ones((D,), jnp.float32))   # ln2_w
        sm = sm.at[7, :D].set(jnp.zeros((D,), jnp.float32))  # ln2_b
        small_l.append(sm)

    return dict(
        wqkv_t=jnp.stack(wqkv_l), wo_t=jnp.stack(wo_l),
        w1_t=jnp.stack(w1_l), w2_t=jnp.stack(w2_l),
        small=jnp.stack(small_l),
    )


if __name__ == "__main__":
    # Small, module-consistent shapes: batch=2, seq=8, d_model=32, nhead=4,
    # dff=64, num_layers=2, activation='relu'.
    B, S, D, NHEAD, DFF, NUM_LAYERS = 2, 8, 32, 4, 64, 2
    ACTIVATION = "relu"

    key = jax.random.PRNGKey(0)
    kx, kp = jax.random.split(key)
    x = jax.random.normal(kx, (B, S, D), jnp.float32)
    params = init_params(kp, D, NHEAD, DFF, NUM_LAYERS)

    y = transformer_block(x, params, nhead=NHEAD, activation=ACTIVATION)
    jax.block_until_ready(y)
    assert y.shape == (B, S, D) and y.dtype == jnp.float32
    assert bool(jnp.isfinite(y).all())
    print("KERNEL_OK")
</pallas_src>

<mosaic_0001>
module attributes {stable_mosaic.version = 11 : i64} {
  func.func @transformer_block_kernel(%arg0: i32, %arg1: i32, %arg2: memref<2x8x32xf32, #tpu.memory_space<vmem>>, %arg3: memref<1x32x96xbf16, #tpu.memory_space<vmem>>, %arg4: memref<1x32x32xbf16, #tpu.memory_space<vmem>>, %arg5: memref<1x32x64xbf16, #tpu.memory_space<vmem>>, %arg6: memref<1x64x32xbf16, #tpu.memory_space<vmem>>, %arg7: memref<1x8x96xf32, #tpu.memory_space<vmem>>, %arg8: memref<2x8x32xf32, #tpu.memory_space<vmem>>, %arg9: memref<2x8x32xf32, #tpu.memory_space<vmem>>) attributes {dimension_semantics = [#tpu.dimension_semantics<parallel>, #tpu.dimension_semantics<arbitrary>], iteration_bounds = array<i64: 1, 2>, scalar_prefetch = 0 : i64, scratch_operands = 1 : i64, tpu.core_type = #tpu.core_type<tc>, window_params = [{transform_indices = @transform_0, window_bounds = array<i64: 2, 8, 32>}, {transform_indices = @transform_1, window_bounds = array<i64: 1, 32, 96>}, {transform_indices = @transform_2, window_bounds = array<i64: 1, 32, 32>}, {transform_indices = @transform_3, window_bounds = array<i64: 1, 32, 64>}, {transform_indices = @transform_4, window_bounds = array<i64: 1, 64, 32>}, {transform_indices = @transform_5, window_bounds = array<i64: 1, 8, 96>}, {transform_indices = @transform_6, window_bounds = array<i64: 2, 8, 32>}]} {
    %c0_i32 = arith.constant 0 : i32
    %0 = arith.cmpi eq, %arg1, %c0_i32 : i32
    %1 = arith.extui %0 : i1 to i32
    %c0_i32_0 = arith.constant 0 : i32
    %2 = arith.cmpi ne, %1, %c0_i32_0 : i32
    scf.if %2 {
      %c0_42 = arith.constant 0 : index
      %c0_43 = arith.constant 0 : index
      %c0_44 = arith.constant 0 : index
      %135 = vector.load %arg2[%c0_42, %c0_43, %c0_44] : memref<2x8x32xf32, #tpu.memory_space<vmem>>, vector<2x8x32xf32>
      %c0_45 = arith.constant 0 : index
      %c0_46 = arith.constant 0 : index
      %c0_47 = arith.constant 0 : index
      %136 = vector.load %arg9[%c0_45, %c0_46, %c0_47] : memref<2x8x32xf32, #tpu.memory_space<vmem>>, vector<2x8x32xf32>
      tpu.vector_store %arg9[%c0_45, %c0_46, %c0_47], %135 {strides = array<i32>} : memref<2x8x32xf32, #tpu.memory_space<vmem>>, vector<2x8x32xf32>,
    } else {
    }
    %c0 = arith.constant 0 : index
    %c0_1 = arith.constant 0 : index
    %c0_2 = arith.constant 0 : index
    %3 = vector.load %arg9[%c0, %c0_1, %c0_2] : memref<2x8x32xf32, #tpu.memory_space<vmem>>, vector<2x8x32xf32>
    %4 = vector.shape_cast %3 : vector<2x8x32xf32> to vector<16x32xf32>
    %c0_3 = arith.constant 0 : index
    %c0_4 = arith.constant 0 : index
    %c0_5 = arith.constant 0 : index
    %5 = vector.load %arg7[%c0_3, %c0_4, %c0_5] : memref<1x8x96xf32, #tpu.memory_space<vmem>>, vector<1x8x96xf32>
    %6 = vector.shape_cast %5 : vector<1x8x96xf32> to vector<8x96xf32>
    %7 = vector.extract_strided_slice %6 {offsets = [0, 0], sizes = [1, 96], strides = [1, 1]} : vector<8x96xf32> to vector<1x96xf32>
    %8 = vector.extract_strided_slice %6 {offsets = [1, 0], sizes = [1, 32], strides = [1, 1]} : vector<8x96xf32> to vector<1x32xf32>
    %9 = vector.extract_strided_slice %6 {offsets = [2, 0], sizes = [1, 32], strides = [1, 1]} : vector<8x96xf32> to vector<1x32xf32>
    %10 = vector.extract_strided_slice %6 {offsets = [3, 0], sizes = [1, 32], strides = [1, 1]} : vector<8x96xf32> to vector<1x32xf32>
    %11 = vector.extract_strided_slice %6 {offsets = [4, 0], sizes = [1, 64], strides = [1, 1]} : vector<8x96xf32> to vector<1x64xf32>
    %12 = vector.extract_strided_slice %6 {offsets = [5, 0], sizes = [1, 32], strides = [1, 1]} : vector<8x96xf32> to vector<1x32xf32>
    %13 = vector.extract_strided_slice %6 {offsets = [6, 0], sizes = [1, 32], strides = [1, 1]} : vector<8x96xf32> to vector<1x32xf32>
    %14 = vector.extract_strided_slice %6 {offsets = [7, 0], sizes = [1, 32], strides = [1, 1]} : vector<8x96xf32> to vector<1x32xf32>
    %15 = arith.truncf %4 : vector<16x32xf32> to vector<16x32xbf16>
    %c0_6 = arith.constant 0 : index
    %c0_7 = arith.constant 0 : index
    %c0_8 = arith.constant 0 : index
    %16 = vector.load %arg3[%c0_6, %c0_7, %c0_8] : memref<1x32x96xbf16, #tpu.memory_space<vmem>>, vector<1x32x96xbf16>
    %17 = vector.shape_cast %16 : vector<1x32x96xbf16> to vector<32x96xbf16>
    %cst = arith.constant dense<0.000000e+00> : vector<16x96xf32>
    %18 = tpu.matmul %15, %17, %cst {dimension_numbers = #tpu.dot_dimension_numbers<[1], [0], [0], [1], [0, 0, 1, 1], [], []>} : vector<16x32xbf16>, vector<32x96xbf16>, vector<16x96xf32> -> vector<16x96xf32>
    %19 = vector.broadcast %7 : vector<1x96xf32> to vector<16x96xf32>
    %20 = arith.addf %18, %19 : vector<16x96xf32>
    %21 = vector.extract_strided_slice %20 {offsets = [0, 0], sizes = [16, 32], strides = [1, 1]} : vector<16x96xf32> to vector<16x32xf32>
    %22 = arith.truncf %21 : vector<16x32xf32> to vector<16x32xbf16>
    %23 = vector.shape_cast %22 : vector<16x32xbf16> to vector<16x4x8xbf16>
    %24 = tpu.transpose %23, [1, 0, 2] : vector<16x4x8xbf16> -> vector<4x16x8xbf16>
    %25 = vector.shape_cast %24 : vector<4x16x8xbf16> to vector<8x8x8xbf16>
    %26 = vector.extract_strided_slice %20 {offsets = [0, 32], sizes = [16, 32], strides = [1, 1]} : vector<16x96xf32> to vector<16x32xf32>
    %27 = arith.truncf %26 : vector<16x32xf32> to vector<16x32xbf16>
    %28 = vector.shape_cast %27 : vector<16x32xbf16> to vector<16x4x8xbf16>
    %29 = tpu.transpose %28, [1, 0, 2] : vector<16x4x8xbf16> -> vector<4x16x8xbf16>
    %30 = vector.shape_cast %29 : vector<4x16x8xbf16> to vector<8x8x8xbf16>
    %31 = vector.extract_strided_slice %20 {offsets = [0, 64], sizes = [16, 32], strides = [1, 1]} : vector<16x96xf32> to vector<16x32xf32>
    %32 = arith.truncf %31 : vector<16x32xf32> to vector<16x32xbf16>
    %33 = vector.shape_cast %32 : vector<16x32xbf16> to vector<16x4x8xbf16>
    %34 = tpu.transpose %33, [1, 0, 2] : vector<16x4x8xbf16> -> vector<4x16x8xbf16>
    %35 = vector.shape_cast %34 : vector<4x16x8xbf16> to vector<8x8x8xbf16>
    %cst_9 = arith.constant 0xFF800000 : f32
    %36 = vector.broadcast %cst_9 : f32 to vector<8x8x1xf32>
    %cst_10 = arith.constant 0.000000e+00 : f32
    %37 = vector.broadcast %cst_10 : f32 to vector<8x8x1xf32>
    %cst_11 = arith.constant 0.000000e+00 : f32
    %38 = vector.broadcast %cst_11 : f32 to vector<8x8x8xf32>
    "tpu.trace_start"() <{level = 10 : i32, message = "hqd,hkd->hqk"}> : () -> ()
    %cst_12 = arith.constant dense<0.000000e+00> : vector<8x8x8xf32>
    %39 = tpu.matmul %25, %30, %cst_12 {dimension_numbers = #tpu.dot_dimension_numbers<[2], [2], [1], [1], [0, 0, 0, 1, 1, 1], [0], [0]>} : vector<8x8x8xbf16>, vector<8x8x8xbf16>, vector<8x8x8xf32> -> vector<8x8x8xf32>
    "tpu.trace_stop"() : () -> ()
    %cst_13 = arith.constant dense<0xFF800000> : vector<8x8xf32>
    %40 = vector.multi_reduction <maximumf>, %39, %cst_13 [2] : vector<8x8x8xf32> to vector<8x8xf32>
    %41 = vector.shape_cast %40 : vector<8x8xf32> to vector<8x8x1xf32>
    %42 = arith.maximumf %36, %41 : vector<8x8x1xf32>
    %43 = arith.subf %36, %42 : vector<8x8x1xf32>
    %44 = math.exp %43 : vector<8x8x1xf32>
    %45 = vector.broadcast %42 : vector<8x8x1xf32> to vector<8x8x8xf32>
    %46 = arith.subf %39, %45 : vector<8x8x8xf32>
    %47 = math.exp %46 : vector<8x8x8xf32>
    %48 = arith.mulf %44, %37 : vector<8x8x1xf32>
    %cst_14 = arith.constant dense<0.000000e+00> : vector<8x8xf32>
    %49 = vector.multi_reduction <add>, %47, %cst_14 [2] : vector<8x8x8xf32> to vector<8x8xf32>
    %50 = vector.shape_cast %49 : vector<8x8xf32> to vector<8x8x1xf32>
    %51 = arith.addf %48, %50 : vector<8x8x1xf32>
    %52 = vector.broadcast %44 : vector<8x8x1xf32> to vector<8x8x8xf32>
    %53 = arith.mulf %52, %38 : vector<8x8x8xf32>
    %54 = arith.truncf %47 : vector<8x8x8xf32> to vector<8x8x8xbf16>
    "tpu.trace_start"() <{level = 10 : i32, message = "hqk,hkd->hqd"}> : () -> ()
    %cst_15 = arith.constant dense<0.000000e+00> : vector<8x8x8xf32>
    %55 = tpu.matmul %54, %35, %cst_15 {dimension_numbers = #tpu.dot_dimension_numbers<[2], [1], [1], [2], [0, 0, 0, 1, 1, 2], [0], [0]>} : vector<8x8x8xbf16>, vector<8x8x8xbf16>, vector<8x8x8xf32> -> vector<8x8x8xf32>
    "tpu.trace_stop"() : () -> ()
    %56 = arith.addf %53, %55 : vector<8x8x8xf32>
    %57 = tpu.reciprocal %51 {approx = true} : vector<8x8x1xf32> -> vector<8x8x1xf32>
    %58 = vector.broadcast %57 : vector<8x8x1xf32> to vector<8x8x8xf32>
    %59 = arith.mulf %56, %58 : vector<8x8x8xf32>
    %60 = vector.shape_cast %59 : vector<8x8x8xf32> to vector<4x16x8xf32>
    %61 = tpu.transpose %60, [1, 0, 2] : vector<4x16x8xf32> -> vector<16x4x8xf32>
    %62 = vector.shape_cast %61 : vector<16x4x8xf32> to vector<16x32xf32>
    %63 = arith.truncf %62 : vector<16x32xf32> to vector<16x32xbf16>
    %c0_16 = arith.constant 0 : index
    %c0_17 = arith.constant 0 : index
    %c0_18 = arith.constant 0 : index
    %64 = vector.load %arg4[%c0_16, %c0_17, %c0_18] : memref<1x32x32xbf16, #tpu.memory_space<vmem>>, vector<1x32x32xbf16>
    %65 = vector.shape_cast %64 : vector<1x32x32xbf16> to vector<32x32xbf16>
    %cst_19 = arith.constant dense<0.000000e+00> : vector<16x32xf32>
    %66 = tpu.matmul %63, %65, %cst_19 {dimension_numbers = #tpu.dot_dimension_numbers<[1], [0], [0], [1], [0, 0, 1, 1], [], []>} : vector<16x32xbf16>, vector<32x32xbf16>, vector<16x32xf32> -> vector<16x32xf32>
    %67 = vector.broadcast %8 : vector<1x32xf32> to vector<16x32xf32>
    %68 = arith.addf %66, %67 : vector<16x32xf32>
    %69 = arith.addf %4, %68 : vector<16x32xf32>
    %cst_20 = arith.constant dense<0.000000e+00> : vector<16xf32>
    %70 = vector.multi_reduction <add>, %69, %cst_20 [1] : vector<16x32xf32> to vector<16xf32>
    %71 = vector.shape_cast %70 : vector<16xf32> to vector<16x1xf32>
    %cst_21 = arith.constant 3.200000e+01 : f32
    %72 = vector.broadcast %cst_21 : f32 to vector<16x1xf32>
    %73 = arith.divf %71, %72 : vector<16x1xf32>
    %74 = vector.broadcast %73 : vector<16x1xf32> to vector<16x32xf32>
    %75 = arith.subf %69, %74 : vector<16x32xf32>
    %76 = arith.mulf %75, %75 : vector<16x32xf32>
    %cst_22 = arith.constant dense<0.000000e+00> : vector<16xf32>
    %77 = vector.multi_reduction <add>, %76, %cst_22 [1] : vector<16x32xf32> to vector<16xf32>
    %78 = vector.shape_cast %77 : vector<16xf32> to vector<16x1xf32>
    %cst_23 = arith.constant 3.200000e+01 : f32
    %79 = vector.broadcast %cst_23 : f32 to vector<16x1xf32>
    %80 = arith.divf %78, %79 : vector<16x1xf32>
    %81 = vector.broadcast %73 : vector<16x1xf32> to vector<16x32xf32>
    %82 = arith.subf %69, %81 : vector<16x32xf32>
    %cst_24 = arith.constant 9.99999974E-6 : f32
    %83 = vector.broadcast %cst_24 : f32 to vector<16x1xf32>
    %84 = arith.addf %80, %83 : vector<16x1xf32>
    %85 = math.rsqrt %84 : vector<16x1xf32>
    %86 = vector.broadcast %85 : vector<16x1xf32> to vector<16x32xf32>
    %87 = arith.mulf %82, %86 : vector<16x32xf32>
    %88 = vector.broadcast %9 : vector<1x32xf32> to vector<16x32xf32>
    %89 = arith.mulf %87, %88 : vector<16x32xf32>
    %90 = vector.broadcast %10 : vector<1x32xf32> to vector<16x32xf32>
    %91 = arith.addf %89, %90 : vector<16x32xf32>
    %92 = arith.truncf %91 : vector<16x32xf32> to vector<16x32xbf16>
    %c0_25 = arith.constant 0 : index
    %c0_26 = arith.constant 0 : index
    %c0_27 = arith.constant 0 : index
    %93 = vector.load %arg5[%c0_25, %c0_26, %c0_27] : memref<1x32x64xbf16, #tpu.memory_space<vmem>>, vector<1x32x64xbf16>
    %94 = vector.shape_cast %93 : vector<1x32x64xbf16> to vector<32x64xbf16>
    %cst_28 = arith.constant dense<0.000000e+00> : vector<16x64xf32>
    %95 = tpu.matmul %92, %94, %cst_28 {dimension_numbers = #tpu.dot_dimension_numbers<[1], [0], [0], [1], [0, 0, 1, 1], [], []>} : vector<16x32xbf16>, vector<32x64xbf16>, vector<16x64xf32> -> vector<16x64xf32>
    %96 = vector.broadcast %11 : vector<1x64xf32> to vector<16x64xf32>
    %97 = arith.addf %95, %96 : vector<16x64xf32>
    %cst_29 = arith.constant 0.000000e+00 : f32
    %98 = vector.broadcast %cst_29 : f32 to vector<16x64xf32>
    %99 = arith.maximumf %97, %98 : vector<16x64xf32>
    %100 = arith.truncf %99 : vector<16x64xf32> to vector<16x64xbf16>
    %c0_30 = arith.constant 0 : index
    %c0_31 = arith.constant 0 : index
    %c0_32 = arith.constant 0 : index
    %101 = vector.load %arg6[%c0_30, %c0_31, %c0_32] : memref<1x64x32xbf16, #tpu.memory_space<vmem>>, vector<1x64x32xbf16>
    %102 = vector.shape_cast %101 : vector<1x64x32xbf16> to vector<64x32xbf16>
    %cst_33 = arith.constant dense<0.000000e+00> : vector<16x32xf32>
    %103 = tpu.matmul %100, %102, %cst_33 {dimension_numbers = #tpu.dot_dimension_numbers<[1], [0], [0], [1], [0, 0, 1, 1], [], []>} : vector<16x64xbf16>, vector<64x32xbf16>, vector<16x32xf32> -> vector<16x32xf32>
    %104 = vector.broadcast %12 : vector<1x32xf32> to vector<16x32xf32>
    %105 = arith.addf %103, %104 : vector<16x32xf32>
    %106 = arith.addf %91, %105 : vector<16x32xf32>
    %cst_34 = arith.constant dense<0.000000e+00> : vector<16xf32>
    %107 = vector.multi_reduction <add>, %106, %cst_34 [1] : vector<16x32xf32> to vector<16xf32>
    %108 = vector.shape_cast %107 : vector<16xf32> to vector<16x1xf32>
    %cst_35 = arith.constant 3.200000e+01 : f32
    %109 = vector.broadcast %cst_35 : f32 to vector<16x1xf32>
    %110 = arith.divf %108, %109 : vector<16x1xf32>
    %111 = vector.broadcast %110 : vector<16x1xf32> to vector<16x32xf32>
    %112 = arith.subf %106, %111 : vector<16x32xf32>
    %113 = arith.mulf %112, %112 : vector<16x32xf32>
    %cst_36 = arith.constant dense<0.000000e+00> : vector<16xf32>
    %114 = vector.multi_reduction <add>, %113, %cst_36 [1] : vector<16x32xf32> to vector<16xf32>
    %115 = vector.shape_cast %114 : vector<16xf32> to vector<16x1xf32>
    %cst_37 = arith.constant 3.200000e+01 : f32
    %116 = vector.broadcast %cst_37 : f32 to vector<16x1xf32>
    %117 = arith.divf %115, %116 : vector<16x1xf32>
    %118 = vector.broadcast %110 : vector<16x1xf32> to vector<16x32xf32>
    %119 = arith.subf %106, %118 : vector<16x32xf32>
    %cst_38 = arith.constant 9.99999974E-6 : f32
    %120 = vector.broadcast %cst_38 : f32 to vector<16x1xf32>
    %121 = arith.addf %117, %120 : vector<16x1xf32>
    %122 = math.rsqrt %121 : vector<16x1xf32>
    %123 = vector.broadcast %122 : vector<16x1xf32> to vector<16x32xf32>
    %124 = arith.mulf %119, %123 : vector<16x32xf32>
    %125 = vector.broadcast %13 : vector<1x32xf32> to vector<16x32xf32>
    %126 = arith.mulf %124, %125 : vector<16x32xf32>
    %127 = vector.broadcast %14 : vector<1x32xf32> to vector<16x32xf32>
    %128 = arith.addf %126, %127 : vector<16x32xf32>
    %c1_i32 = arith.constant 1 : i32
    %129 = arith.cmpi slt, %arg1, %c1_i32 : i32
    %130 = arith.extui %129 : i1 to i32
    %c0_i32_39 = arith.constant 0 : i32
    %131 = arith.cmpi ne, %130, %c0_i32_39 : i32
    scf.if %131 {
      %135 = vector.shape_cast %128 : vector<16x32xf32> to vector<2x8x32xf32>
      %c0_42 = arith.constant 0 : index
      %c0_43 = arith.constant 0 : index
      %c0_44 = arith.constant 0 : index
      %136 = vector.load %arg9[%c0_42, %c0_43, %c0_44] : memref<2x8x32xf32, #tpu.memory_space<vmem>>, vector<2x8x32xf32>
      tpu.vector_store %arg9[%c0_42, %c0_43, %c0_44], %135 {strides = array<i32>} : memref<2x8x32xf32, #tpu.memory_space<vmem>>, vector<2x8x32xf32>,
    } else {
    }
    %c1_i32_40 = arith.constant 1 : i32
    %132 = arith.cmpi eq, %arg1, %c1_i32_40 : i32
    %133 = arith.extui %132 : i1 to i32
    %c0_i32_41 = arith.constant 0 : i32
    %134 = arith.cmpi ne, %133, %c0_i32_41 : i32
    scf.if %134 {
      %135 = vector.shape_cast %128 : vector<16x32xf32> to vector<2x8x32xf32>
      %c0_42 = arith.constant 0 : index
      %c0_43 = arith.constant 0 : index
      %c0_44 = arith.constant 0 : index
      %136 = vector.load %arg8[%c0_42, %c0_43, %c0_44] : memref<2x8x32xf32, #tpu.memory_space<vmem>>, vector<2x8x32xf32>
      tpu.vector_store %arg8[%c0_42, %c0_43, %c0_44], %135 {strides = array<i32>} : memref<2x8x32xf32, #tpu.memory_space<vmem>>, vector<2x8x32xf32>,
    } else {
    }
    return
  }
  func.func @transform_0(%arg0: i32, %arg1: i32) -> (i32, i32, i32) {
    %c0_i32 = arith.constant 0 : i32
    %c0_i32_0 = arith.constant 0 : i32
    %c0_i32_1 = arith.constant 0 : i32
    return %arg0, %c0_i32, %c0_i32_0 : i32, i32, i32
  }
  func.func @transform_1(%arg0: i32, %arg1: i32) -> (i32, i32, i32) {
    %c0_i32 = arith.constant 0 : i32
    %c0_i32_0 = arith.constant 0 : i32
    %c0_i32_1 = arith.constant 0 : i32
    return %arg1, %c0_i32, %c0_i32_0 : i32, i32, i32
  }
  func.func @transform_2(%arg0: i32, %arg1: i32) -> (i32, i32, i32) {
    %c0_i32 = arith.constant 0 : i32
    %c0_i32_0 = arith.constant 0 : i32
    %c0_i32_1 = arith.constant 0 : i32
    return %arg1, %c0_i32, %c0_i32_0 : i32, i32, i32
  }
  func.func @transform_3(%arg0: i32, %arg1: i32) -> (i32, i32, i32) {
    %c0_i32 = arith.constant 0 : i32
    %c0_i32_0 = arith.constant 0 : i32
    %c0_i32_1 = arith.constant 0 : i32
    return %arg1, %c0_i32, %c0_i32_0 : i32, i32, i32
  }
  func.func @transform_4(%arg0: i32, %arg1: i32) -> (i32, i32, i32) {
    %c0_i32 = arith.constant 0 : i32
    %c0_i32_0 = arith.constant 0 : i32
    %c0_i32_1 = arith.constant 0 : i32
    return %arg1, %c0_i32, %c0_i32_0 : i32, i32, i32
  }
  func.func @transform_5(%arg0: i32, %arg1: i32) -> (i32, i32, i32) {
    %c0_i32 = arith.constant 0 : i32
    %c0_i32_0 = arith.constant 0 : i32
    %c0_i32_1 = arith.constant 0 : i32
    return %arg1, %c0_i32, %c0_i32_0 : i32, i32, i32
  }
  func.func @transform_6(%arg0: i32, %arg1: i32) -> (i32, i32, i32) {
    %c0_i32 = arith.constant 0 : i32
    %c0_i32_0 = arith.constant 0 : i32
    %c0_i32_1 = arith.constant 0 : i32
    return %arg0, %c0_i32, %c0_i32_0 : i32, i32, i32
  }
}

</mosaic_0001>

<llo_original>
// kernel: tpu_custom_call.1
$region0: #{tpu_custom_call.1}
  #allocation0 [shape = 'u32[]', space=smem, size = 0x4, offset = 0x4, fixed_abs, tag = 'smem constant byte address 0x4 - core index']
  #allocation1 [shape = 'u32[72,128]{1,0:T(1,128)}', space=vmem, size = 0x9000, scoped, tag = 'internal scratch']
  #allocation2 [shape = 'f32[2,8,32]{2,1,0:T(8,128)}', space=vmem, size = 0x2000, scoped, tag = 'scratch operand']
  %s0 = inlined_call_operand.hbm [shape: f32[2,8,32], index: 0, kind: input, shape index: {}]
  %s1 = inlined_call_operand.vmem [shape: bf16[2,32,96], index: 1, kind: input, shape index: {}]
  %s2 = inlined_call_operand.vmem [shape: bf16[2,32,32], index: 2, kind: input, shape index: {}]
  %s3 = inlined_call_operand.vmem [shape: bf16[2,32,64], index: 3, kind: input, shape index: {}]
  %s4 = inlined_call_operand.vmem [shape: bf16[2,64,32], index: 4, kind: input, shape index: {}]
  %s5 = inlined_call_operand.hbm [shape: f32[2,8,96], index: 5, kind: input, shape index: {}]
  %s6 = inlined_call_operand.hbm [shape: f32[2,8,32], index: 6, kind: output, shape index: {}]
  %s7 = sld [smem:[#allocation0]]
  $region77: #{tpu_custom_call.1} parent=0
    _
  %s9 = ssub.s32 1, %s7
  %s10 = scalar_select 0, %s9, %s7
  $region1: #{tpu_custom_call.1} parent=0
    #allocation3 [shape = 'u8[8192]{0}', space=vmem, size = 0x2000, scoped, tag = 'input window, operand 0, single buffered']
    #allocation4 [shape = 's32[2]{0}', space=sflag, size = 0x8, scoped, tag = 'scoped memory for tpu_custom_call.1']
    #allocation5 [shape = 's32[2]{0}', space=sflag, size = 0x8, scoped, tag = 'scoped memory for tpu_custom_call.1']
    #allocation6 [shape = 'u8[8192]{0}', space=vmem, size = 0x2000, scoped, tag = 'input window, operand 5']
    #allocation7 [shape = 's32[2]{0}', space=sflag, size = 0x8, scoped, tag = 'scoped memory for tpu_custom_call.1']
    #allocation8 [shape = 'u8[8192]{0}', space=vmem, size = 0x2000, scoped, tag = 'output window, operand 0, single buffered']
    %11 = vsyncpa [#allocation4], 0
    %12 = vsyncpa [#allocation7], 0
    %s13 = scalar_lea.sflag [#allocation7], 1
    %14 = vsyncpa %s13, 0
    %15 = vsyncpa [#allocation5], 0
    loop: start=0, step=1, limit=4
    $region2: #{tpu_custom_call.1} parent=1 // loop_pre_header
      _
    $region3: #{tpu_custom_call.1} parent=1 // loop_header
      %s17 = sphi 0, %s21
      %p18 = scmp.ge.s32.totalorder %s17, 4
      %s24 = sphi 0, %s36
      %s25 = sphi 0, %s32
      %s26 = sphi 0, %s24
      %s27 = sphi 0, %s25
      %s28 = sphi 0, %s26
      %s29 = sphi 0, %s27
      %s39 = sphi 0, %s41
      %s42 = sphi 0, %s39
      %s43 = sphi 0, %s42
      %s59 = sphi 0, %s43
      %s65 = sphi 0, %s67
      %s68 = sphi 0, %s65
      %s69 = sphi 0, %s68
      %s85 = sphi 0, %s69
      %s91 = sphi 0, %s93
      %s94 = sphi 0, %s91
      %s95 = sphi 0, %s94
      %s111 = sphi 0, %s95
      %s117 = sphi 0, %s119
      %s120 = sphi 0, %s117
      %s121 = sphi 0, %s120
      %s137 = sphi 0, %s121
      %s143 = sphi 0, %s145
      %s146 = sphi 0, %s143
      %s147 = sphi 0, %s146
      %s163 = sphi 0, %s147
      %s169 = sphi 0, %s171
      %s172 = sphi 0, %s169
      %s173 = sphi 0, %s172
      %s189 = sphi 0, %s173
      %s195 = sphi 0, %s197
      %s198 = sphi 0, %s195
      %s199 = sphi 0, %s198
      %s215 = sphi 0, %s199
    $region4: #{tpu_custom_call.1} parent=1 // loop_header_branch
      %20 = sbr.rel (%p18) target = $region8
    $region5: #{tpu_custom_call.1} parent=1 // loop_body
      %s22 = ssub.s32 %s17, 1
      %s23 = ssub.s32 %s17, 2
      %s30 = sadd.s32 1, %s25
      %p31 = scmp.ge.s32.totalorder %s30, 2
      %s32 = scalar_select %p31, 0, %s30
      %s33 = sadd.s32 1, %s24
      %s34 = scalar_select %p31, %s33, %s24
      %p35 = scmp.ge.s32.totalorder %s34, 1
      %s36 = scalar_select %p35, 0, %s34
      %s37 = ssub.s32 %s24, %s36
      %p38 = scmp.eq.s32.totalorder %s37, 0
      %s40 = sadd.s32 %s39, 1
      %s41 = scalar_select %p38, %s39, %s40
      %p44 = pneg %p38
      %p45 = scmp.eq.s32.totalorder %s17, 1
      %p46 = por %p44, %p45
      %p47 = scmp.ne.s32.totalorder %s39, %s42
      %p48 = scmp.eq.s32.totalorder %s17, 0
      %p49 = por %p47, %p48
      %p50 = scmp.ne.s32.totalorder %s39, %s42
      %p51 = scmp.eq.s32.totalorder %s22, 1
      %p52 = por %p50, %p51
      %p53 = scmp.ne.s32.totalorder %s42, %s43
      %p54 = scmp.eq.s32.totalorder %s22, 0
      %p55 = por %p53, %p54
      %p56 = scmp.ne.s32.totalorder %s42, %s43
      %p57 = scmp.eq.s32.totalorder %s23, 1
      %p58 = por %p56, %p57
      %p60 = scmp.ne.s32.totalorder %s43, %s59
      %p61 = scmp.eq.s32.totalorder %s23, 0
      %p62 = por %p60, %p61
      %s63 = ssub.s32 %s25, %s32
      %p64 = scmp.eq.s32.totalorder %s63, 0
      %s66 = sadd.s32 %s65, 1
      %s67 = scalar_select %p64, %s65, %s66
      %p70 = pneg %p64
      %p71 = scmp.eq.s32.totalorder %s17, 1
      %p72 = por %p70, %p71
      %p73 = scmp.ne.s32.totalorder %s65, %s68
      %p74 = scmp.eq.s32.totalorder %s17, 0
      %p75 = por %p73, %p74
      %p76 = scmp.ne.s32.totalorder %s65, %s68
      %p77 = scmp.eq.s32.totalorder %s22, 1
      %p78 = por %p76, %p77
      %p79 = scmp.ne.s32.totalorder %s68, %s69
      %p80 = scmp.eq.s32.totalorder %s22, 0
      %p81 = por %p79, %p80
      %p82 = scmp.ne.s32.totalorder %s68, %s69
      %p83 = scmp.eq.s32.totalorder %s23, 1
      %p84 = por %p82, %p83
      %p86 = scmp.ne.s32.totalorder %s69, %s85
      %p87 = scmp.eq.s32.totalorder %s23, 0
      %p88 = por %p86, %p87
      %s89 = ssub.s32 %s25, %s32
      %p90 = scmp.eq.s32.totalorder %s89, 0
      %s92 = sadd.s32 %s91, 1
      %s93 = scalar_select %p90, %s91, %s92
      %p96 = pneg %p90
      %p97 = scmp.eq.s32.totalorder %s17, 1
      %p98 = por %p96, %p97
      %p99 = scmp.ne.s32.totalorder %s91, %s94
      %p100 = scmp.eq.s32.totalorder %s17, 0
      %p101 = por %p99, %p100
      %p102 = scmp.ne.s32.totalorder %s91, %s94
      %p103 = scmp.eq.s32.totalorder %s22, 1
      %p104 = por %p102, %p103
      %p105 = scmp.ne.s32.totalorder %s94, %s95
      %p106 = scmp.eq.s32.totalorder %s22, 0
      %p107 = por %p105, %p106
      %p108 = scmp.ne.s32.totalorder %s94, %s95
      %p109 = scmp.eq.s32.totalorder %s23, 1
      %p110 = por %p108, %p109
      %p112 = scmp.ne.s32.totalorder %s95, %s111
      %p113 = scmp.eq.s32.totalorder %s23, 0
      %p114 = por %p112, %p113
      %s115 = ssub.s32 %s25, %s32
      %p116 = scmp.eq.s32.totalorder %s115, 0
      %s118 = sadd.s32 %s117, 1
      %s119 = scalar_select %p116, %s117, %s118
      %p122 = pneg %p116
      %p123 = scmp.eq.s32.totalorder %s17, 1
      %p124 = por %p122, %p123
      %p125 = scmp.ne.s32.totalorder %s117, %s120
      %p126 = scmp.eq.s32.totalorder %s17, 0
      %p127 = por %p125, %p126
      %p128 = scmp.ne.s32.totalorder %s117, %s120
      %p129 = scmp.eq.s32.totalorder %s22, 1
      %p130 = por %p128, %p129
      %p131 = scmp.ne.s32.totalorder %s120, %s121
      %p132 = scmp.eq.s32.totalorder %s22, 0
      %p133 = por %p131, %p132
      %p134 = scmp.ne.s32.totalorder %s120, %s121
      %p135 = scmp.eq.s32.totalorder %s23, 1
      %p136 = por %p134, %p135
      %p138 = scmp.ne.s32.totalorder %s121, %s137
      %p139 = scmp.eq.s32.totalorder %s23, 0
      %p140 = por %p138, %p139
      %s141 = ssub.s32 %s25, %s32
      %p142 = scmp.eq.s32.totalorder %s141, 0
      %s144 = sadd.s32 %s143, 1
      %s145 = scalar_select %p142, %s143, %s144
      %p148 = pneg %p142
      %p149 = scmp.eq.s32.totalorder %s17, 1
      %p150 = por %p148, %p149
      %p151 = scmp.ne.s32.totalorder %s143, %s146
      %p152 = scmp.eq.s32.totalorder %s17, 0
      %p153 = por %p151, %p152
      %p154 = scmp.ne.s32.totalorder %s143, %s146
      %p155 = scmp.eq.s32.totalorder %s22, 1
      %p156 = por %p154, %p155
      %p157 = scmp.ne.s32.totalorder %s146, %s147
      %p158 = scmp.eq.s32.totalorder %s22, 0
      %p159 = por %p157, %p158
      %p160 = scmp.ne.s32.totalorder %s146, %s147
      %p161 = scmp.eq.s32.totalorder %s23, 1
      %p162 = por %p160, %p161
      %p164 = scmp.ne.s32.totalorder %s147, %s163
      %p165 = scmp.eq.s32.totalorder %s23, 0
      %p166 = por %p164, %p165
      %s167 = ssub.s32 %s25, %s32
      %p168 = scmp.eq.s32.totalorder %s167, 0
      %s170 = sadd.s32 %s169, 1
      %s171 = scalar_select %p168, %s169, %s170
      %p174 = pneg %p168
      %p175 = scmp.eq.s32.totalorder %s17, 1
      %p176 = por %p174, %p175
      %p177 = scmp.ne.s32.totalorder %s169, %s172
      %p178 = scmp.eq.s32.totalorder %s17, 0
      %p179 = por %p177, %p178
      %p180 = scmp.ne.s32.totalorder %s169, %s172
      %p181 = scmp.eq.s32.totalorder %s22, 1
      %p182 = por %p180, %p181
      %p183 = scmp.ne.s32.totalorder %s172, %s173
      %p184 = scmp.eq.s32.totalorder %s22, 0
      %p185 = por %p183, %p184
      %p186 = scmp.ne.s32.totalorder %s172, %s173
      %p187 = scmp.eq.s32.totalorder %s23, 1
      %p188 = por %p186, %p187
      %p190 = scmp.ne.s32.totalorder %s173, %s189
      %p191 = scmp.eq.s32.totalorder %s23, 0
      %p192 = por %p190, %p191
      %s193 = ssub.s32 %s24, %s36
      %p194 = scmp.eq.s32.totalorder %s193, 0
      %s196 = sadd.s32 %s195, 1
      %s197 = scalar_select %p194, %s195, %s196
      %p200 = pneg %p194
      %p201 = scmp.eq.s32.totalorder %s17, 1
      %p202 = por %p200, %p201
      %p203 = scmp.ne.s32.totalorder %s195, %s198
      %p204 = scmp.eq.s32.totalorder %s17, 0
      %p205 = por %p203, %p204
      %p206 = scmp.ne.s32.totalorder %s195, %s198
      %p207 = scmp.eq.s32.totalorder %s22, 1
      %p208 = por %p206, %p207
      %p209 = scmp.ne.s32.totalorder %s198, %s199
      %p210 = scmp.eq.s32.totalorder %s22, 0
      %p211 = por %p209, %p210
      %p212 = scmp.ne.s32.totalorder %s198, %s199
      %p213 = scmp.eq.s32.totalorder %s23, 1
      %p214 = por %p212, %p213
      %p216 = scmp.ne.s32.totalorder %s199, %s215
      %p217 = scmp.eq.s32.totalorder %s23, 0
      %p218 = por %p216, %p217
      %p219 = scmp.le.s32.totalorder 1, %s17
      %p220 = scmp.lt.s32.totalorder %s17, 3
      %p221 = pnand %p219, %p220
      %p222 = pneg %p221
      // Predicated region
      $region9: #{tpu_custom_call.1} parent=5 // pred_check
        _
      $region10: #{tpu_custom_call.1} parent=5 // pred_check_branch
        %224 = sbr.rel (%p221) target = $region12
      $region11: #{tpu_custom_call.1} parent=5 // pred_region
        %s225 = ssub.s32 %s17, 1
        // Predicated region
        $region13: #{tpu_custom_call.1} parent=11 // pred_check
          %p226 = pneg %p55
        $region14: #{tpu_custom_call.1} parent=11 // pred_check_branch
          %228 = sbr.rel (%p226) target = $region16
        $region15: #{tpu_custom_call.1} parent=11 // pred_region
          %s229 = smul.u32 2, %s26
          %231 = vsyncadd [#allocation4], 0
          %s232 = smul.addr %s229, 8
          %s233 = scalar_lea.hbm %s0, %s232
          %s234 = sshll.u32 %s233, 4
          %s235 = int_to_ptr.hbm [resolvable:$true] %s234
          %s236 = sshll.u32 [#allocation3], 4
          %s237 = int_to_ptr.vmem [resolvable:$true] %s236
          %242 = dma.hbm_to_vmem [thread:$0]  %s235, 256, %s237, [#allocation4], 128, 128, 8
        $region16: #{tpu_custom_call.1} parent=11 // pred_fallthru
          _
      $region12: #{tpu_custom_call.1} parent=5 // pred_fallthru
        _
      %p243 = scmp.lt.s32.totalorder %s17, 2
      // Predicated region
      $region17: #{tpu_custom_call.1} parent=5 // pred_check
        %p244 = pneg %p243
      $region18: #{tpu_custom_call.1} parent=5 // pred_check_branch
        %246 = sbr.rel (%p244) target = $region20
      $region19: #{tpu_custom_call.1} parent=5 // pred_region
        // Predicated region
        $region21: #{tpu_custom_call.1} parent=19 // pred_check
          %p247 = pneg %p75
        $region22: #{tpu_custom_call.1} parent=19 // pred_check_branch
          %249 = sbr.rel (%p247) target = $region24
        $region23: #{tpu_custom_call.1} parent=19 // pred_region
          %p250 = scmp.lt.s32.totalorder %s25, 1
          %s251 = scalar_select %p250, %s25, 1
          %s252 = smul.addr %s251, 4
          %s253 = smul.addr %s252, 4
          %s254 = scalar_lea.vmem %s1, %s253
        $region24: #{tpu_custom_call.1} parent=19 // pred_fallthru
          _
        // Predicated region
        $region25: #{tpu_custom_call.1} parent=19 // pred_check
          %p255 = pneg %p101
        $region26: #{tpu_custom_call.1} parent=19 // pred_check_branch
          %257 = sbr.rel (%p255) target = $region28
        $region27: #{tpu_custom_call.1} parent=19 // pred_region
          %p258 = scmp.lt.s32.totalorder %s25, 1
          %s259 = scalar_select %p258, %s25, 1
          %s260 = smul.addr %s259, 4
          %s261 = smul.addr %s260, 4
          %s262 = scalar_lea.vmem %s2, %s261
        $region28: #{tpu_custom_call.1} parent=19 // pred_fallthru
          _
        // Predicated region
        $region29: #{tpu_custom_call.1} parent=19 // pred_check
          %p263 = pneg %p127
        $region30: #{tpu_custom_call.1} parent=19 // pred_check_branch
          %265 = sbr.rel (%p263) target = $region32
        $region31: #{tpu_custom_call.1} parent=19 // pred_region
          %p266 = scmp.lt.s32.totalorder %s25, 1
          %s267 = scalar_select %p266, %s25, 1
          %s268 = smul.addr %s267, 4
          %s269 = smul.addr %s268, 4
          %s270 = scalar_lea.vmem %s3, %s269
        $region32: #{tpu_custom_call.1} parent=19 // pred_fallthru
          _
        // Predicated region
        $region33: #{tpu_custom_call.1} parent=19 // pred_check
          %p271 = pneg %p153
        $region34: #{tpu_custom_call.1} parent=19 // pred_check_branch
          %273 = sbr.rel (%p271) target = $region36
        $region35: #{tpu_custom_call.1} parent=19 // pred_region
          %p274 = scmp.lt.s32.totalorder %s25, 1
          %s275 = scalar_select %p274, %s25, 1
          %s276 = smul.addr %s275, 8
          %s277 = smul.addr %s276, 4
          %s278 = scalar_lea.vmem %s4, %s277
        $region36: #{tpu_custom_call.1} parent=19 // pred_fallthru
          _
        // Predicated region
        $region37: #{tpu_custom_call.1} parent=19 // pred_check
          %p279 = pneg %p179
        $region38: #{tpu_custom_call.1} parent=19 // pred_check_branch
          %281 = sbr.rel (%p279) target = $region40
        $region39: #{tpu_custom_call.1} parent=19 // pred_region
          %s282 = sand.u32 %s169, 1
          %s283 = scalar_lea.sflag [#allocation7], %s282
          %s284 = sand.u32 %s169, 1
          %s285 = smul.addr %s284, 8
          %s286 = scalar_lea.vmem [#allocation6], %s285
          %288 = vsyncadd %s283, 0
          %s289 = smul.addr %s25, 8
          %s290 = scalar_lea.hbm %s5, %s289
          %s292 = sshll.u32 %s290, 4
          %s293 = int_to_ptr.hbm [resolvable:$true] %s292
          %s294 = sshll.u32 %s286, 4
          %s295 = int_to_ptr.vmem [resolvable:$true] %s294
          %297 = dma.hbm_to_vmem [thread:$0]  %s293, 128, %s295, %s283
        $region40: #{tpu_custom_call.1} parent=19 // pred_fallthru
          _
      $region20: #{tpu_custom_call.1} parent=5 // pred_fallthru
        _
      %p298 = scmp.le.s32.totalorder 1, %s17
      %p299 = scmp.lt.s32.totalorder %s17, 3
      %p300 = pnand %p298, %p299
      %p301 = pneg %p300
      // Predicated region
      $region41: #{tpu_custom_call.1} parent=5 // pred_check
        _
      $region42: #{tpu_custom_call.1} parent=5 // pred_check_branch
        %303 = sbr.rel (%p300) target = $region44
      $region43: #{tpu_custom_call.1} parent=5 // pred_region
        %s304 = ssub.s32 %s17, 1
        // Predicated region
        $region45: #{tpu_custom_call.1} parent=43 // pred_check
          %p305 = pneg %p55
        $region46: #{tpu_custom_call.1} parent=43 // pred_check_branch
          %307 = sbr.rel (%p305) target = $region48
        $region47: #{tpu_custom_call.1} parent=43 // pred_region
          %309 = dma.done [#allocation4], 256
        $region48: #{tpu_custom_call.1} parent=43 // pred_fallthru
          _
        %s310 = sand.u32 %s172, 1
        %s311 = scalar_lea.sflag [#allocation7], %s310
        %s312 = sand.u32 %s172, 1
        %s313 = smul.addr %s312, 8
        %s314 = scalar_lea.vmem [#allocation6], %s313
        // Predicated region
        $region49: #{tpu_custom_call.1} parent=43 // pred_check
          %p315 = pneg %p185
        $region50: #{tpu_custom_call.1} parent=43 // pred_check_branch
          %317 = sbr.rel (%p315) target = $region52
        $region51: #{tpu_custom_call.1} parent=43 // pred_region
          %319 = dma.done %s311, 128
        $region52: #{tpu_custom_call.1} parent=43 // pred_fallthru
          _
        %p320 = pneg %p55
        %p321 = pneg %p52
        %p322 = scmp.lt.s32.totalorder %s27, 1
        %s323 = scalar_select %p322, %s27, 1
        %s324 = smul.addr %s323, 4
        %s325 = smul.addr %s324, 4
        %s326 = scalar_lea.vmem %s1, %s325
        %p327 = pneg %p81
        %p328 = pneg %p78
        %p329 = scmp.lt.s32.totalorder %s27, 1
        %s330 = scalar_select %p329, %s27, 1
        %s331 = smul.addr %s330, 4
        %s332 = smul.addr %s331, 4
        %s333 = scalar_lea.vmem %s2, %s332
        %p334 = pneg %p107
        %p335 = pneg %p104
        %p336 = scmp.lt.s32.totalorder %s27, 1
        %s337 = scalar_select %p336, %s27, 1
        %s338 = smul.addr %s337, 4
        %s339 = smul.addr %s338, 4
        %s340 = scalar_lea.vmem %s3, %s339
        %p341 = pneg %p133
        %p342 = pneg %p130
        %p343 = scmp.lt.s32.totalorder %s27, 1
        %s344 = scalar_select %p343, %s27, 1
        %s345 = smul.addr %s344, 8
        %s346 = smul.addr %s345, 4
        %s347 = scalar_lea.vmem %s4, %s346
        %p348 = pneg %p159
        %p349 = pneg %p156
        %s350 = sand.u32 %s172, 1
        %s351 = scalar_lea.sflag [#allocation7], %s350
        %s352 = sand.u32 %s172, 1
        %s353 = smul.addr %s352, 8
        %s354 = scalar_lea.vmem [#allocation6], %s353
        %p355 = pneg %p185
        %p356 = pneg %p182
        %p357 = pneg %p211
        %p358 = pneg %p208
        %s359 = smul.u32 2, %s26
        %p360 = scmp.lt.s32.totalorder %s27, 1
        %s361 = scalar_select %p360, %s27, 1
        %s362 = smul.addr %s361, 4
        %s363 = smul.addr %s362, 4
        %s364 = scalar_lea.vmem %s1, %s363
        %p365 = scmp.lt.s32.totalorder %s27, 1
        %s366 = scalar_select %p365, %s27, 1
        %s367 = smul.addr %s366, 4
        %s368 = smul.addr %s367, 4
        %s369 = scalar_lea.vmem %s2, %s368
        %p370 = scmp.lt.s32.totalorder %s27, 1
        %s371 = scalar_select %p370, %s27, 1
        %s372 = smul.addr %s371, 4
        %s373 = smul.addr %s372, 4
        %s374 = scalar_lea.vmem %s3, %s373
        %p375 = scmp.lt.s32.totalorder %s27, 1
        %s376 = scalar_select %p375, %s27, 1
        %s377 = smul.addr %s376, 8
        %s378 = smul.addr %s377, 4
        %s379 = scalar_lea.vmem %s4, %s378
        %s380 = smul.u32 2, %s26
        %p382 = scmp.eq.s32.totalorder %s27, 0
        // Predicated region
        $region53: #{tpu_custom_call.1} parent=43 // pred_check
          %p383 = pneg %p382
        $region54: #{tpu_custom_call.1} parent=43 // pred_check_branch
          %385 = sbr.rel (%p383) target = $region56
        $region55: #{tpu_custom_call.1} parent=43 // pred_region
          %v386 = vld [vmem:[#allocation3] sm:$0xff]
          %v387 = vld [vmem:[#allocation3 + $0x8] sm:$0xff]
          %vm388 = vcmask 261120
          %389 = vst.msk [vmem:[#allocation2] sm:$0xff] %vm388, %v386
          %390 = vst.msk [vmem:[#allocation2 + $0x8] sm:$0xff] %vm388, %v387
        $region56: #{tpu_custom_call.1} parent=43 // pred_fallthru
          _
        %v391 = vld [vmem:[#allocation2] sm:$0xff]
        %v392 = vld [vmem:[#allocation2 + $0x8] sm:$0xff]
        %v393 = vld [vmem:[%s314] sm:$0xff]
        %v394 = vpack.c.bf16 %v392, %v391
        %v395 = vld [vmem:[%s364] sm:$0xf]
        %v396 = vld [vmem:[%s364 + $0x4] sm:$0xf]
        %v397 = vld [vmem:[%s364 + $0x8] sm:$0xf]
        %v398 = vld [vmem:[%s364 + $0xc] sm:$0xf]
        %v399 = vperm.slane %v393, 0
        %v404 = vunpack.c.l.b16 %v395
        %v405 = vunpack.c.l.b16 %v396
        %v406 = vunpack.c.l.b16 %v397
        %v407 = vunpack.c.l.b16 %v398
        %v408 = vpack.c.b16 %v405, %v404
        %v409 = vpack.c.b16 %v407, %v406
        %vm412 = vcmask 261120
        %v414 = vsel %vm412, %v394, 0
        %416 = vmatpush.bf16.msra.mxu0 0
        %417 = vmatpush.bf16.msra.mxu0 0
        %418 = vmatpush.bf16.msra.mxu0 0
        %419 = vmatpush.bf16.msra.mxu0 0
        %420 = vmatpush.bf16.msra.mxu0 0
        %421 = vmatpush.bf16.msra.mxu0 0
        %422 = vmatpush.bf16.msra.mxu0 %v409
        %423 = vmatpush.bf16.msra.mxu0 %v408
        %424 = vmatmul.bf16.gmra.mxu0 %v414
        %v425 = vpop.f32.mrf.mxu0
        %v426 = vadd.f32 %v399, %v425
        %v427 = vpop.f32.mrf.mxu0
        %v428 = vadd.f32 %v399, %v427
        %429 = vdwg.mxu0
        %v430 = vpack.c.bf16 %v426, %v426
        %v431 = vpack.c.bf16 %v428, %v428
        %434 = vrot.lane.b32.xlu0 %v430, 120
        %v435 = vpop.permute.xlu0 %434
        %436 = vrot.lane.b32.xlu0 %v431, 120
        %v437 = vpop.permute.xlu0 %436
        %438 = vrot.lane.b32.xlu0 %v430, 112
        %v439 = vpop.permute.xlu0 %438
        %440 = vrot.lane.b32.xlu0 %v431, 112
        %v441 = vpop.permute.xlu0 %440
        %442 = vrot.lane.b32.xlu0 %v430, 104
        %v443 = vpop.permute.xlu0 %442
        %444 = vrot.lane.b32.xlu0 %v431, 104
        %v445 = vpop.permute.xlu0 %444
        %v448 = vpack.i.b16 %v435, %v430
        %v449 = vshrl.u32 %v430, 16
        %v450 = vshrl.u32 %v435, 16
        %v451 = vpack.i.b16 %v450, %v449
        %v454 = vpack.i.b16 %v443, %v439
        %v455 = vshrl.u32 %v439, 16
        %v456 = vshrl.u32 %v443, 16
        %v457 = vpack.i.b16 %v456, %v455
        %v460 = vpack.i.b16 %v437, %v431
        %v461 = vshrl.u32 %v431, 16
        %v462 = vshrl.u32 %v437, 16
        %v463 = vpack.i.b16 %v462, %v461
        %v466 = vpack.i.b16 %v445, %v441
        %v467 = vshrl.u32 %v441, 16
        %v468 = vshrl.u32 %v445, 16
        %v469 = vpack.i.b16 %v468, %v467
        %v472 = vunpack.c.l.s4 1983009808
        %v473 = vunpack.c.0.s8 %v472
        %v474 = vperm.slane %v448, %v473
        %v477 = vunpack.c.l.s4 1983009808
        %v478 = vunpack.c.0.s8 %v477
        %v479 = vperm.slane %v454, %v478
        %v480 = vrot.slane %v479, 4
        %vm481 = vcmask 1047556
        %v482 = vsel %vm481, %v480, %v474
        %v483 = vrot.slane %v474, 4
        %v484 = vsel %vm481, %v479, %v483
        %v486 = vunpack.c.l.s4 1934713408
        %v487 = vunpack.c.0.s8 %v486
        %v488 = vperm.slane %v482, %v487
        %v490 = vunpack.c.l.s4 1934713408
        %v491 = vunpack.c.0.s8 %v490
        %v492 = vperm.slane %v484, %v491
        %v493 = vrot.slane %v488, 4
        %v494 = vsel %vm481, 0, %v493
        %v495 = vrot.slane %v492, 4
        %v496 = vsel %vm481, 0, %v495
        %v499 = vunpack.c.l.s4 1983009808
        %v500 = vunpack.c.0.s8 %v499
        %v501 = vperm.slane %v451, %v500
        %v504 = vunpack.c.l.s4 1983009808
        %v505 = vunpack.c.0.s8 %v504
        %v506 = vperm.slane %v457, %v505
        %v507 = vrot.slane %v506, 4
        %v508 = vsel %vm481, %v507, %v501
        %v509 = vrot.slane %v501, 4
        %v510 = vsel %vm481, %v506, %v509
        %v512 = vunpack.c.l.s4 1934713408
        %v513 = vunpack.c.0.s8 %v512
        %v514 = vperm.slane %v508, %v513
        %v516 = vunpack.c.l.s4 1934713408
        %v517 = vunpack.c.0.s8 %v516
        %v518 = vperm.slane %v510, %v517
        %v519 = vrot.slane %v514, 4
        %v520 = vsel %vm481, 0, %v519
        %v521 = vrot.slane %v518, 4
        %v522 = vsel %vm481, 0, %v521
        %v525 = vunpack.c.l.s4 1983009808
        %v526 = vunpack.c.0.s8 %v525
        %v527 = vperm.slane %v460, %v526
        %v530 = vunpack.c.l.s4 1983009808
        %v531 = vunpack.c.0.s8 %v530
        %v532 = vperm.slane %v466, %v531
        %v533 = vrot.slane %v532, 4
        %v534 = vsel %vm481, %v533, %v527
        %v535 = vrot.slane %v527, 4
        %v536 = vsel %vm481, %v532, %v535
        %v538 = vunpack.c.l.s4 1934713408
        %v539 = vunpack.c.0.s8 %v538
        %v540 = vperm.slane %v534, %v539
        %v542 = vunpack.c.l.s4 1934713408
        %v543 = vunpack.c.0.s8 %v542
        %v544 = vperm.slane %v536, %v543
        %v545 = vrot.slane %v540, 4
        %v546 = vsel %vm481, 0, %v545
        %v547 = vrot.slane %v544, 4
        %v548 = vsel %vm481, 0, %v547
        %v551 = vunpack.c.l.s4 1983009808
        %v552 = vunpack.c.0.s8 %v551
        %v553 = vperm.slane %v463, %v552
        %v556 = vunpack.c.l.s4 1983009808
        %v557 = vunpack.c.0.s8 %v556
        %v558 = vperm.slane %v469, %v557
        %v559 = vrot.slane %v558, 4
        %v560 = vsel %vm481, %v559, %v553
        %v561 = vrot.slane %v553, 4
        %v562 = vsel %vm481, %v558, %v561
        %v564 = vunpack.c.l.s4 1934713408
        %v565 = vunpack.c.0.s8 %v564
        %v566 = vperm.slane %v560, %v565
        %v568 = vunpack.c.l.s4 1934713408
        %v569 = vunpack.c.0.s8 %v568
        %v570 = vperm.slane %v562, %v569
        %v571 = vrot.slane %v566, 4
        %v572 = vsel %vm481, 0, %v571
        %v573 = vrot.slane %v570, 4
        %v574 = vsel %vm481, 0, %v573
        %v575 = vsel %vm481, %v495, %v488
        %v577 = vunpack.c.l.s4 1983009808
        %v578 = vunpack.c.0.s8 %v577
        %v579 = vperm.slane %v575, %v578
        %v580 = vrot.slane %v496, 4
        %v581 = vsel %vm481, %v580, %v494
        %v583 = vunpack.c.l.s4 1983009808
        %v584 = vunpack.c.0.s8 %v583
        %v585 = vperm.slane %v581, %v584
        %v586 = vrot.slane %v585, 4
        %v587 = vsel %vm481, %v586, %v579
        %v589 = vunpack.c.l.s4 1934713408
        %v590 = vunpack.c.0.s8 %v589
        %v591 = vperm.slane %v587, %v590
        %v592 = vrot.slane %v591, 4
        %v593 = vsel %vm481, 0, %v592
        %v594 = vsel %vm481, %v521, %v514
        %v596 = vunpack.c.l.s4 1983009808
        %v597 = vunpack.c.0.s8 %v596
        %v598 = vperm.slane %v594, %v597
        %v599 = vrot.slane %v522, 4
        %v600 = vsel %vm481, %v599, %v520
        %v602 = vunpack.c.l.s4 1983009808
        %v603 = vunpack.c.0.s8 %v602
        %v604 = vperm.slane %v600, %v603
        %v605 = vrot.slane %v604, 4
        %v606 = vsel %vm481, %v605, %v598
        %v608 = vunpack.c.l.s4 1934713408
        %v609 = vunpack.c.0.s8 %v608
        %v610 = vperm.slane %v606, %v609
        %v611 = vrot.slane %v610, 4
        %v612 = vsel %vm481, 0, %v611
        %v613 = vsel %vm481, %v547, %v540
        %v615 = vunpack.c.l.s4 1983009808
        %v616 = vunpack.c.0.s8 %v615
        %v617 = vperm.slane %v613, %v616
        %v618 = vrot.slane %v548, 4
        %v619 = vsel %vm481, %v618, %v546
        %v621 = vunpack.c.l.s4 1983009808
        %v622 = vunpack.c.0.s8 %v621
        %v623 = vperm.slane %v619, %v622
        %v624 = vrot.slane %v623, 4
        %v625 = vsel %vm481, %v624, %v617
        %v627 = vunpack.c.l.s4 1934713408
        %v628 = vunpack.c.0.s8 %v627
        %v629 = vperm.slane %v625, %v628
        %v630 = vrot.slane %v629, 4
        %v631 = vsel %vm481, 0, %v630
        %v632 = vsel %vm481, %v573, %v566
        %v634 = vunpack.c.l.s4 1983009808
        %v635 = vunpack.c.0.s8 %v634
        %v636 = vperm.slane %v632, %v635
        %v637 = vrot.slane %v574, 4
        %v638 = vsel %vm481, %v637, %v572
        %v640 = vunpack.c.l.s4 1983009808
        %v641 = vunpack.c.0.s8 %v640
        %v642 = vperm.slane %v638, %v641
        %v643 = vrot.slane %v642, 4
        %v644 = vsel %vm481, %v643, %v636
        %v646 = vunpack.c.l.s4 1934713408
        %v647 = vunpack.c.0.s8 %v646
        %v648 = vperm.slane %v644, %v647
        %v649 = vrot.slane %v648, 4
        %v650 = vsel %vm481, 0, %v649
        %v653 = vpack.i.b16 %v610, %v591
        %v654 = vshrl.u32 %v591, 16
        %v655 = vshrl.u32 %v610, 16
        %v656 = vpack.i.b16 %v655, %v654
        %v659 = vpack.i.b16 %v612, %v593
        %v660 = vshrl.u32 %v593, 16
        %v661 = vshrl.u32 %v612, 16
        %v662 = vpack.i.b16 %v661, %v660
        %v665 = vpack.i.b16 %v648, %v629
        %v666 = vshrl.u32 %v629, 16
        %v667 = vshrl.u32 %v648, 16
        %v668 = vpack.i.b16 %v667, %v666
        %v671 = vpack.i.b16 %v650, %v631
        %v672 = vshrl.u32 %v631, 16
        %v673 = vshrl.u32 %v650, 16
        %v674 = vpack.i.b16 %v673, %v672
        %675 = vrot.lane.b32.xlu0 %v430, 96
        %v676 = vpop.permute.xlu0 %675
        %677 = vrot.lane.b32.xlu0 %v431, 96
        %v678 = vpop.permute.xlu0 %677
        %679 = vrot.lane.b32.xlu0 %v435, 96
        %v680 = vpop.permute.xlu0 %679
        %681 = vrot.lane.b32.xlu0 %v437, 96
        %v682 = vpop.permute.xlu0 %681
        %683 = vrot.lane.b32.xlu0 %v439, 96
        %v684 = vpop.permute.xlu0 %683
        %685 = vrot.lane.b32.xlu0 %v441, 96
        %v686 = vpop.permute.xlu0 %685
        %687 = vrot.lane.b32.xlu0 %v443, 96
        %v688 = vpop.permute.xlu0 %687
        %689 = vrot.lane.b32.xlu0 %v445, 96
        %v690 = vpop.permute.xlu0 %689
        %v693 = vpack.i.b16 %v680, %v676
        %v694 = vshrl.u32 %v676, 16
        %v695 = vshrl.u32 %v680, 16
        %v696 = vpack.i.b16 %v695, %v694
        %v699 = vpack.i.b16 %v688, %v684
        %v700 = vshrl.u32 %v684, 16
        %v701 = vshrl.u32 %v688, 16
        %v702 = vpack.i.b16 %v701, %v700
        %v705 = vpack.i.b16 %v682, %v678
        %v706 = vshrl.u32 %v678, 16
        %v707 = vshrl.u32 %v682, 16
        %v708 = vpack.i.b16 %v707, %v706
        %v711 = vpack.i.b16 %v690, %v686
        %v712 = vshrl.u32 %v686, 16
        %v713 = vshrl.u32 %v690, 16
        %v714 = vpack.i.b16 %v713, %v712
        %v717 = vunpack.c.l.s4 1983009808
        %v718 = vunpack.c.0.s8 %v717
        %v719 = vperm.slane %v693, %v718
        %v722 = vunpack.c.l.s4 1983009808
        %v723 = vunpack.c.0.s8 %v722
        %v724 = vperm.slane %v699, %v723
        %v725 = vrot.slane %v724, 4
        %v726 = vsel %vm481, %v725, %v719
        %v727 = vrot.slane %v719, 4
        %v728 = vsel %vm481, %v724, %v727
        %v730 = vunpack.c.l.s4 1934713408
        %v731 = vunpack.c.0.s8 %v730
        %v732 = vperm.slane %v726, %v731
        %v734 = vunpack.c.l.s4 1934713408
        %v735 = vunpack.c.0.s8 %v734
        %v736 = vperm.slane %v728, %v735
        %v737 = vrot.slane %v732, 4
        %v738 = vsel %vm481, 0, %v737
        %v739 = vrot.slane %v736, 4
        %v740 = vsel %vm481, 0, %v739
        %v743 = vunpack.c.l.s4 1983009808
        %v744 = vunpack.c.0.s8 %v743
        %v745 = vperm.slane %v696, %v744
        %v748 = vunpack.c.l.s4 1983009808
        %v749 = vunpack.c.0.s8 %v748
        %v750 = vperm.slane %v702, %v749
        %v751 = vrot.slane %v750, 4
        %v752 = vsel %vm481, %v751, %v745
        %v753 = vrot.slane %v745, 4
        %v754 = vsel %vm481, %v750, %v753
        %v756 = vunpack.c.l.s4 1934713408
        %v757 = vunpack.c.0.s8 %v756
        %v758 = vperm.slane %v752, %v757
        %v760 = vunpack.c.l.s4 1934713408
        %v761 = vunpack.c.0.s8 %v760
        %v762 = vperm.slane %v754, %v761
        %v763 = vrot.slane %v758, 4
        %v764 = vsel %vm481, 0, %v763
        %v765 = vrot.slane %v762, 4
        %v766 = vsel %vm481, 0, %v765
        %v769 = vunpack.c.l.s4 1983009808
        %v770 = vunpack.c.0.s8 %v769
        %v771 = vperm.slane %v705, %v770
        %v774 = vunpack.c.l.s4 1983009808
        %v775 = vunpack.c.0.s8 %v774
        %v776 = vperm.slane %v711, %v775
        %v777 = vrot.slane %v776, 4
        %v778 = vsel %vm481, %v777, %v771
        %v779 = vrot.slane %v771, 4
        %v780 = vsel %vm481, %v776, %v779
        %v782 = vunpack.c.l.s4 1934713408
        %v783 = vunpack.c.0.s8 %v782
        %v784 = vperm.slane %v778, %v783
        %v786 = vunpack.c.l.s4 1934713408
        %v787 = vunpack.c.0.s8 %v786
        %v788 = vperm.slane %v780, %v787
        %v789 = vrot.slane %v784, 4
        %v790 = vsel %vm481, 0, %v789
        %v791 = vrot.slane %v788, 4
        %v792 = vsel %vm481, 0, %v791
        %v795 = vunpack.c.l.s4 1983009808
        %v796 = vunpack.c.0.s8 %v795
        %v797 = vperm.slane %v708, %v796
        %v800 = vunpack.c.l.s4 1983009808
        %v801 = vunpack.c.0.s8 %v800
        %v802 = vperm.slane %v714, %v801
        %v803 = vrot.slane %v802, 4
        %v804 = vsel %vm481, %v803, %v797
        %v805 = vrot.slane %v797, 4
        %v806 = vsel %vm481, %v802, %v805
        %v808 = vunpack.c.l.s4 1934713408
        %v809 = vunpack.c.0.s8 %v808
        %v810 = vperm.slane %v804, %v809
        %v812 = vunpack.c.l.s4 1934713408
        %v813 = vunpack.c.0.s8 %v812
        %v814 = vperm.slane %v806, %v813
        %v815 = vrot.slane %v810, 4
        %v816 = vsel %vm481, 0, %v815
        %v817 = vrot.slane %v814, 4
        %v818 = vsel %vm481, 0, %v817
        %v819 = vsel %vm481, %v739, %v732
        %v821 = vunpack.c.l.s4 1983009808
        %v822 = vunpack.c.0.s8 %v821
        %v823 = vperm.slane %v819, %v822
        %v824 = vrot.slane %v740, 4
        %v825 = vsel %vm481, %v824, %v738
        %v827 = vunpack.c.l.s4 1983009808
        %v828 = vunpack.c.0.s8 %v827
        %v829 = vperm.slane %v825, %v828
        %v830 = vrot.slane %v829, 4
        %v831 = vsel %vm481, %v830, %v823
        %v833 = vunpack.c.l.s4 1934713408
        %v834 = vunpack.c.0.s8 %v833
        %v835 = vperm.slane %v831, %v834
        %v836 = vrot.slane %v835, 4
        %v837 = vsel %vm481, 0, %v836
        %v838 = vsel %vm481, %v765, %v758
        %v840 = vunpack.c.l.s4 1983009808
        %v841 = vunpack.c.0.s8 %v840
        %v842 = vperm.slane %v838, %v841
        %v843 = vrot.slane %v766, 4
        %v844 = vsel %vm481, %v843, %v764
        %v846 = vunpack.c.l.s4 1983009808
        %v847 = vunpack.c.0.s8 %v846
        %v848 = vperm.slane %v844, %v847
        %v849 = vrot.slane %v848, 4
        %v850 = vsel %vm481, %v849, %v842
        %v852 = vunpack.c.l.s4 1934713408
        %v853 = vunpack.c.0.s8 %v852
        %v854 = vperm.slane %v850, %v853
        %v855 = vrot.slane %v854, 4
        %v856 = vsel %vm481, 0, %v855
        %v857 = vsel %vm481, %v791, %v784
        %v859 = vunpack.c.l.s4 1983009808
        %v860 = vunpack.c.0.s8 %v859
        %v861 = vperm.slane %v857, %v860
        %v862 = vrot.slane %v792, 4
        %v863 = vsel %vm481, %v862, %v790
        %v865 = vunpack.c.l.s4 1983009808
        %v866 = vunpack.c.0.s8 %v865
        %v867 = vperm.slane %v863, %v866
        %v868 = vrot.slane %v867, 4
        %v869 = vsel %vm481, %v868, %v861
        %v871 = vunpack.c.l.s4 1934713408
        %v872 = vunpack.c.0.s8 %v871
        %v873 = vperm.slane %v869, %v872
        %v874 = vrot.slane %v873, 4
        %v875 = vsel %vm481, 0, %v874
        %v876 = vsel %vm481, %v817, %v810
        %v878 = vunpack.c.l.s4 1983009808
        %v879 = vunpack.c.0.s8 %v878
        %v880 = vperm.slane %v876, %v879
        %v881 = vrot.slane %v818, 4
        %v882 = vsel %vm481, %v881, %v816
        %v884 = vunpack.c.l.s4 1983009808
        %v885 = vunpack.c.0.s8 %v884
        %v886 = vperm.slane %v882, %v885
        %v887 = vrot.slane %v886, 4
        %v888 = vsel %vm481, %v887, %v880
        %v890 = vunpack.c.l.s4 1934713408
        %v891 = vunpack.c.0.s8 %v890
        %v892 = vperm.slane %v888, %v891
        %v893 = vrot.slane %v892, 4
        %v894 = vsel %vm481, 0, %v893
        %v897 = vpack.i.b16 %v854, %v835
        %v898 = vshrl.u32 %v835, 16
        %v899 = vshrl.u32 %v854, 16
        %v900 = vpack.i.b16 %v899, %v898
        %v903 = vpack.i.b16 %v856, %v837
        %v904 = vshrl.u32 %v837, 16
        %v905 = vshrl.u32 %v856, 16
        %v906 = vpack.i.b16 %v905, %v904
        %v909 = vpack.i.b16 %v892, %v873
        %v910 = vshrl.u32 %v873, 16
        %v911 = vshrl.u32 %v892, 16
        %v912 = vpack.i.b16 %v911, %v910
        %v915 = vpack.i.b16 %v894, %v875
        %v916 = vshrl.u32 %v875, 16
        %v917 = vshrl.u32 %v894, 16
        %v918 = vpack.i.b16 %v917, %v916
        %919 = vrot.lane.b32.xlu0 %v430, 64
        %v920 = vpop.permute.xlu0 %919
        %921 = vrot.lane.b32.xlu0 %v431, 64
        %v922 = vpop.permute.xlu0 %921
        %923 = vrot.lane.b32.xlu0 %v435, 64
        %v924 = vpop.permute.xlu0 %923
        %925 = vrot.lane.b32.xlu0 %v437, 64
        %v926 = vpop.permute.xlu0 %925
        %927 = vrot.lane.b32.xlu0 %v439, 64
        %v928 = vpop.permute.xlu0 %927
        %929 = vrot.lane.b32.xlu0 %v441, 64
        %v930 = vpop.permute.xlu0 %929
        %931 = vrot.lane.b32.xlu0 %v443, 64
        %v932 = vpop.permute.xlu0 %931
        %933 = vrot.lane.b32.xlu0 %v445, 64
        %v934 = vpop.permute.xlu0 %933
        %v937 = vpack.i.b16 %v924, %v920
        %v938 = vshrl.u32 %v920, 16
        %v939 = vshrl.u32 %v924, 16
        %v940 = vpack.i.b16 %v939, %v938
        %v943 = vpack.i.b16 %v932, %v928
        %v944 = vshrl.u32 %v928, 16
        %v945 = vshrl.u32 %v932, 16
        %v946 = vpack.i.b16 %v945, %v944
        %v949 = vpack.i.b16 %v926, %v922
        %v950 = vshrl.u32 %v922, 16
        %v951 = vshrl.u32 %v926, 16
        %v952 = vpack.i.b16 %v951, %v950
        %v955 = vpack.i.b16 %v934, %v930
        %v956 = vshrl.u32 %v930, 16
        %v957 = vshrl.u32 %v934, 16
        %v958 = vpack.i.b16 %v957, %v956
        %v961 = vunpack.c.l.s4 1983009808
        %v962 = vunpack.c.0.s8 %v961
        %v963 = vperm.slane %v937, %v962
        %v966 = vunpack.c.l.s4 1983009808
        %v967 = vunpack.c.0.s8 %v966
        %v968 = vperm.slane %v943, %v967
        %v969 = vrot.slane %v968, 4
        %v970 = vsel %vm481, %v969, %v963
        %v971 = vrot.slane %v963, 4
        %v972 = vsel %vm481, %v968, %v971
        %v974 = vunpack.c.l.s4 1934713408
        %v975 = vunpack.c.0.s8 %v974
        %v976 = vperm.slane %v970, %v975
        %v978 = vunpack.c.l.s4 1934713408
        %v979 = vunpack.c.0.s8 %v978
        %v980 = vperm.slane %v972, %v979
        %v981 = vrot.slane %v976, 4
        %v982 = vsel %vm481, 0, %v981
        %v983 = vrot.slane %v980, 4
        %v984 = vsel %vm481, 0, %v983
        %v987 = vunpack.c.l.s4 1983009808
        %v988 = vunpack.c.0.s8 %v987
        %v989 = vperm.slane %v940, %v988
        %v992 = vunpack.c.l.s4 1983009808
        %v993 = vunpack.c.0.s8 %v992
        %v994 = vperm.slane %v946, %v993
        %v995 = vrot.slane %v994, 4
        %v996 = vsel %vm481, %v995, %v989
        %v997 = vrot.slane %v989, 4
        %v998 = vsel %vm481, %v994, %v997
        %v1000 = vunpack.c.l.s4 1934713408
        %v1001 = vunpack.c.0.s8 %v1000
        %v1002 = vperm.slane %v996, %v1001
        %v1004 = vunpack.c.l.s4 1934713408
        %v1005 = vunpack.c.0.s8 %v1004
        %v1006 = vperm.slane %v998, %v1005
        %v1007 = vrot.slane %v1002, 4
        %v1008 = vsel %vm481, 0, %v1007
        %v1009 = vrot.slane %v1006, 4
        %v1010 = vsel %vm481, 0, %v1009
        %v1013 = vunpack.c.l.s4 1983009808
        %v1014 = vunpack.c.0.s8 %v1013
        %v1015 = vperm.slane %v949, %v1014
        %v1018 = vunpack.c.l.s4 1983009808
        %v1019 = vunpack.c.0.s8 %v1018
        %v1020 = vperm.slane %v955, %v1019
        %v1021 = vrot.slane %v1020, 4
        %v1022 = vsel %vm481, %v1021, %v1015
        %v1023 = vrot.slane %v1015, 4
        %v1024 = vsel %vm481, %v1020, %v1023
        %v1026 = vunpack.c.l.s4 1934713408
        %v1027 = vunpack.c.0.s8 %v1026
        %v1028 = vperm.slane %v1022, %v1027
        %v1030 = vunpack.c.l.s4 1934713408
        %v1031 = vunpack.c.0.s8 %v1030
        %v1032 = vperm.slane %v1024, %v1031
        %v1033 = vrot.slane %v1028, 4
        %v1034 = vsel %vm481, 0, %v1033
        %v1035 = vrot.slane %v1032, 4
        %v1036 = vsel %vm481, 0, %v1035
        %v1039 = vunpack.c.l.s4 1983009808
        %v1040 = vunpack.c.0.s8 %v1039
        %v1041 = vperm.slane %v952, %v1040
        %v1044 = vunpack.c.l.s4 1983009808
        %v1045 = vunpack.c.0.s8 %v1044
        %v1046 = vperm.slane %v958, %v1045
        %v1047 = vrot.slane %v1046, 4
        %v1048 = vsel %vm481, %v1047, %v1041
        %v1049 = vrot.slane %v1041, 4
        %v1050 = vsel %vm481, %v1046, %v1049
        %v1052 = vunpack.c.l.s4 1934713408
        %v1053 = vunpack.c.0.s8 %v1052
        %v1054 = vperm.slane %v1048, %v1053
        %v1056 = vunpack.c.l.s4 1934713408
        %v1057 = vunpack.c.0.s8 %v1056
        %v1058 = vperm.slane %v1050, %v1057
        %v1059 = vrot.slane %v1054, 4
        %v1060 = vsel %vm481, 0, %v1059
        %v1061 = vrot.slane %v1058, 4
        %v1062 = vsel %vm481, 0, %v1061
        %v1063 = vsel %vm481, %v983, %v976
        %v1065 = vunpack.c.l.s4 1983009808
        %v1066 = vunpack.c.0.s8 %v1065
        %v1067 = vperm.slane %v1063, %v1066
        %v1068 = vrot.slane %v984, 4
        %v1069 = vsel %vm481, %v1068, %v982
        %v1071 = vunpack.c.l.s4 1983009808
        %v1072 = vunpack.c.0.s8 %v1071
        %v1073 = vperm.slane %v1069, %v1072
        %v1074 = vrot.slane %v1073, 4
        %v1075 = vsel %vm481, %v1074, %v1067
        %v1077 = vunpack.c.l.s4 1934713408
        %v1078 = vunpack.c.0.s8 %v1077
        %v1079 = vperm.slane %v1075, %v1078
        %v1080 = vrot.slane %v1079, 4
        %v1081 = vsel %vm481, 0, %v1080
        %v1082 = vsel %vm481, %v1009, %v1002
        %v1084 = vunpack.c.l.s4 1983009808
        %v1085 = vunpack.c.0.s8 %v1084
        %v1086 = vperm.slane %v1082, %v1085
        %v1087 = vrot.slane %v1010, 4
        %v1088 = vsel %vm481, %v1087, %v1008
        %v1090 = vunpack.c.l.s4 1983009808
        %v1091 = vunpack.c.0.s8 %v1090
        %v1092 = vperm.slane %v1088, %v1091
        %v1093 = vrot.slane %v1092, 4
        %v1094 = vsel %vm481, %v1093, %v1086
        %v1096 = vunpack.c.l.s4 1934713408
        %v1097 = vunpack.c.0.s8 %v1096
        %v1098 = vperm.slane %v1094, %v1097
        %v1099 = vrot.slane %v1098, 4
        %v1100 = vsel %vm481, 0, %v1099
        %v1101 = vsel %vm481, %v1035, %v1028
        %v1103 = vunpack.c.l.s4 1983009808
        %v1104 = vunpack.c.0.s8 %v1103
        %v1105 = vperm.slane %v1101, %v1104
        %v1106 = vrot.slane %v1036, 4
        %v1107 = vsel %vm481, %v1106, %v1034
        %v1109 = vunpack.c.l.s4 1983009808
        %v1110 = vunpack.c.0.s8 %v1109
        %v1111 = vperm.slane %v1107, %v1110
        %v1112 = vrot.slane %v1111, 4
        %v1113 = vsel %vm481, %v1112, %v1105
        %v1115 = vunpack.c.l.s4 1934713408
        %v1116 = vunpack.c.0.s8 %v1115
        %v1117 = vperm.slane %v1113, %v1116
        %v1118 = vrot.slane %v1117, 4
        %v1119 = vsel %vm481, 0, %v1118
        %v1120 = vsel %vm481, %v1061, %v1054
        %v1122 = vunpack.c.l.s4 1983009808
        %v1123 = vunpack.c.0.s8 %v1122
        %v1124 = vperm.slane %v1120, %v1123
        %v1125 = vrot.slane %v1062, 4
        %v1126 = vsel %vm481, %v1125, %v1060
        %v1128 = vunpack.c.l.s4 1983009808
        %v1129 = vunpack.c.0.s8 %v1128
        %v1130 = vperm.slane %v1126, %v1129
        %v1131 = vrot.slane %v1130, 4
        %v1132 = vsel %vm481, %v1131, %v1124
        %v1134 = vunpack.c.l.s4 1934713408
        %v1135 = vunpack.c.0.s8 %v1134
        %v1136 = vperm.slane %v1132, %v1135
        %v1137 = vrot.slane %v1136, 4
        %v1138 = vsel %vm481, 0, %v1137
        %v1141 = vpack.i.b16 %v1098, %v1079
        %v1142 = vshrl.u32 %v1079, 16
        %v1143 = vshrl.u32 %v1098, 16
        %v1144 = vpack.i.b16 %v1143, %v1142
        %v1147 = vpack.i.b16 %v1100, %v1081
        %v1148 = vshrl.u32 %v1081, 16
        %v1149 = vshrl.u32 %v1100, 16
        %v1150 = vpack.i.b16 %v1149, %v1148
        %v1153 = vpack.i.b16 %v1136, %v1117
        %v1154 = vshrl.u32 %v1117, 16
        %v1155 = vshrl.u32 %v1136, 16
        %v1156 = vpack.i.b16 %v1155, %v1154
        %v1159 = vpack.i.b16 %v1138, %v1119
        %v1160 = vshrl.u32 %v1119, 16
        %v1161 = vshrl.u32 %v1138, 16
        %v1162 = vpack.i.b16 %v1161, %v1160
        %vm1163 = vcmask 64512
        %v1165 = vsel %vm1163, %v653, 0
        %v1168 = vsel %vm1163, %v897, 0
        %1170 = vmatpush.bf16.xpose.msra.mxu0 0
        %1171 = vmatpush.bf16.xpose.msra.mxu0 0
        %1172 = vmatpush.bf16.xpose.msra.mxu0 0
        %1173 = vmatpush.bf16.xpose.msra.mxu0 0
        %1174 = vmatpush.bf16.xpose.msra.mxu0 0
        %1175 = vmatpush.bf16.xpose.msra.mxu0 0
        %1176 = vmatpush.bf16.xpose.msra.mxu0 0
        %1177 = vmatpush.bf16.xpose.msra.mxu0 %v1168
        %1178 = vmatmul.bf16.gmra.mxu0 %v1165
        %v1179 = vpop.f32.mrf.mxu0
        %v1180 = vadd.f32 0.0, %v1179
        %v1181 = vpop.f32.mrf.mxu0
        %1182 = vdwg.mxu0
        %v1184 = vsel %vm1163, %v665, 0
        %v1187 = vsel %vm1163, %v909, 0
        %1189 = vmatpush.bf16.xpose.msra.mxu0 0
        %1190 = vmatpush.bf16.xpose.msra.mxu0 0
        %1191 = vmatpush.bf16.xpose.msra.mxu0 0
        %1192 = vmatpush.bf16.xpose.msra.mxu0 0
        %1193 = vmatpush.bf16.xpose.msra.mxu0 0
        %1194 = vmatpush.bf16.xpose.msra.mxu0 0
        %1195 = vmatpush.bf16.xpose.msra.mxu0 0
        %1196 = vmatpush.bf16.xpose.msra.mxu0 %v1187
        %1197 = vmatmul.bf16.gmra.mxu0 %v1184
        %v1198 = vpop.f32.mrf.mxu0
        %v1199 = vadd.f32 0.0, %v1198
        %v1200 = vpop.f32.mrf.mxu0
        %1201 = vdwg.mxu0
        %v1203 = vsel %vm1163, %v656, 0
        %v1206 = vsel %vm1163, %v900, 0
        %1208 = vmatpush.bf16.xpose.msra.mxu0 0
        %1209 = vmatpush.bf16.xpose.msra.mxu0 0
        %1210 = vmatpush.bf16.xpose.msra.mxu0 0
        %1211 = vmatpush.bf16.xpose.msra.mxu0 0
        %1212 = vmatpush.bf16.xpose.msra.mxu0 0
        %1213 = vmatpush.bf16.xpose.msra.mxu0 0
        %1214 = vmatpush.bf16.xpose.msra.mxu0 0
        %1215 = vmatpush.bf16.xpose.msra.mxu0 %v1206
        %1216 = vmatmul.bf16.gmra.mxu0 %v1203
        %v1217 = vpop.f32.mrf.mxu0
        %v1218 = vadd.f32 0.0, %v1217
        %v1219 = vpop.f32.mrf.mxu0
        %1220 = vdwg.mxu0
        %v1222 = vsel %vm1163, %v668, 0
        %v1225 = vsel %vm1163, %v912, 0
        %1227 = vmatpush.bf16.xpose.msra.mxu0 0
        %1228 = vmatpush.bf16.xpose.msra.mxu0 0
        %1229 = vmatpush.bf16.xpose.msra.mxu0 0
        %1230 = vmatpush.bf16.xpose.msra.mxu0 0
        %1231 = vmatpush.bf16.xpose.msra.mxu0 0
        %1232 = vmatpush.bf16.xpose.msra.mxu0 0
        %1233 = vmatpush.bf16.xpose.msra.mxu0 0
        %1234 = vmatpush.bf16.xpose.msra.mxu0 %v1225
        %1235 = vmatmul.bf16.gmra.mxu0 %v1222
        %v1236 = vpop.f32.mrf.mxu0
        %v1237 = vadd.f32 0.0, %v1236
        %v1238 = vpop.f32.mrf.mxu0
        %1239 = vdwg.mxu0
        %v1241 = vsel %vm1163, %v659, 0
        %v1244 = vsel %vm1163, %v903, 0
        %1246 = vmatpush.bf16.xpose.msra.mxu0 0
        %1247 = vmatpush.bf16.xpose.msra.mxu0 0
        %1248 = vmatpush.bf16.xpose.msra.mxu0 0
        %1249 = vmatpush.bf16.xpose.msra.mxu0 0
        %1250 = vmatpush.bf16.xpose.msra.mxu0 0
        %1251 = vmatpush.bf16.xpose.msra.mxu0 0
        %1252 = vmatpush.bf16.xpose.msra.mxu0 0
        %1253 = vmatpush.bf16.xpose.msra.mxu0 %v1244
        %1254 = vmatmul.bf16.gmra.mxu0 %v1241
        %v1255 = vpop.f32.mrf.mxu0
        %v1256 = vadd.f32 0.0, %v1255
        %v1257 = vpop.f32.mrf.mxu0
        %1258 = vdwg.mxu0
        %v1260 = vsel %vm1163, %v671, 0
        %v1263 = vsel %vm1163, %v915, 0
        %1265 = vmatpush.bf16.xpose.msra.mxu0 0
        %1266 = vmatpush.bf16.xpose.msra.mxu0 0
        %1267 = vmatpush.bf16.xpose.msra.mxu0 0
        %1268 = vmatpush.bf16.xpose.msra.mxu0 0
        %1269 = vmatpush.bf16.xpose.msra.mxu0 0
        %1270 = vmatpush.bf16.xpose.msra.mxu0 0
        %1271 = vmatpush.bf16.xpose.msra.mxu0 0
        %1272 = vmatpush.bf16.xpose.msra.mxu0 %v1263
        %1273 = vmatmul.bf16.gmra.mxu0 %v1260
        %v1274 = vpop.f32.mrf.mxu0
        %v1275 = vadd.f32 0.0, %v1274
        %v1276 = vpop.f32.mrf.mxu0
        %1277 = vdwg.mxu0
        %v1279 = vsel %vm1163, %v662, 0
        %v1282 = vsel %vm1163, %v906, 0
        %1284 = vmatpush.bf16.xpose.msra.mxu0 0
        %1285 = vmatpush.bf16.xpose.msra.mxu0 0
        %1286 = vmatpush.bf16.xpose.msra.mxu0 0
        %1287 = vmatpush.bf16.xpose.msra.mxu0 0
        %1288 = vmatpush.bf16.xpose.msra.mxu0 0
        %1289 = vmatpush.bf16.xpose.msra.mxu0 0
        %1290 = vmatpush.bf16.xpose.msra.mxu0 0
        %1291 = vmatpush.bf16.xpose.msra.mxu0 %v1282
        %1292 = vmatmul.bf16.gmra.mxu0 %v1279
        %v1293 = vpop.f32.mrf.mxu0
        %v1294 = vadd.f32 0.0, %v1293
        %v1295 = vpop.f32.mrf.mxu0
        %1296 = vdwg.mxu0
        %v1298 = vsel %vm1163, %v674, 0
        %v1301 = vsel %vm1163, %v918, 0
        %1303 = vmatpush.bf16.xpose.msra.mxu0 0
        %1304 = vmatpush.bf16.xpose.msra.mxu0 0
        %1305 = vmatpush.bf16.xpose.msra.mxu0 0
        %1306 = vmatpush.bf16.xpose.msra.mxu0 0
        %1307 = vmatpush.bf16.xpose.msra.mxu0 0
        %1308 = vmatpush.bf16.xpose.msra.mxu0 0
        %1309 = vmatpush.bf16.xpose.msra.mxu0 0
        %1310 = vmatpush.bf16.xpose.msra.mxu0 %v1301
        %1311 = vmatmul.bf16.gmra.mxu0 %v1298
        %v1312 = vpop.f32.mrf.mxu0
        %v1313 = vadd.f32 0.0, %v1312
        %v1314 = vpop.f32.mrf.mxu0
        %1315 = vdwg.mxu0
        %v1316 = vsel %vm1163, %v1180, -inf
        %1317 = vmax.xlane.f32.xlu0 %v1316
        %v1318 = vpop.xlane.xlu0 %1317
        %v1319 = vsel %vm1163, %v1199, -inf
        %1320 = vmax.xlane.f32.xlu0 %v1319
        %v1321 = vpop.xlane.xlu0 %1320
        %v1322 = vsel %vm1163, %v1218, -inf
        %1323 = vmax.xlane.f32.xlu0 %v1322
        %v1324 = vpop.xlane.xlu0 %1323
        %v1325 = vsel %vm1163, %v1237, -inf
        %1326 = vmax.xlane.f32.xlu0 %v1325
        %v1327 = vpop.xlane.xlu0 %1326
        %v1328 = vsel %vm1163, %v1256, -inf
        %1329 = vmax.xlane.f32.xlu0 %v1328
        %v1330 = vpop.xlane.xlu0 %1329
        %v1331 = vsel %vm1163, %v1275, -inf
        %1332 = vmax.xlane.f32.xlu0 %v1331
        %v1333 = vpop.xlane.xlu0 %1332
        %v1334 = vsel %vm1163, %v1294, -inf
        %1335 = vmax.xlane.f32.xlu0 %v1334
        %v1336 = vpop.xlane.xlu0 %1335
        %v1337 = vsel %vm1163, %v1313, -inf
        %1338 = vmax.xlane.f32.xlu0 %v1337
        %v1339 = vpop.xlane.xlu0 %1338
        %v1340 = vsub.f32 -inf, %v1318
        %v1341 = vsub.f32 -inf, %v1321
        %v1342 = vsub.f32 -inf, %v1324
        %v1343 = vsub.f32 -inf, %v1327
        %v1344 = vsub.f32 -inf, %v1330
        %v1345 = vsub.f32 -inf, %v1333
        %v1346 = vsub.f32 -inf, %v1336
        %v1347 = vsub.f32 -inf, %v1339
        %v1348 = vmul.f32 %v1340, 1.442695
        %v1349 = vpow.pop %v1348
        %v1350 = vmul.f32 %v1341, 1.442695
        %v1351 = vpow.pop %v1350
        %v1352 = vmul.f32 %v1342, 1.442695
        %v1353 = vpow.pop %v1352
        %v1354 = vmul.f32 %v1343, 1.442695
        %v1355 = vpow.pop %v1354
        %v1356 = vmul.f32 %v1344, 1.442695
        %v1357 = vpow.pop %v1356
        %v1358 = vmul.f32 %v1345, 1.442695
        %v1359 = vpow.pop %v1358
        %v1360 = vmul.f32 %v1346, 1.442695
        %v1361 = vpow.pop %v1360
        %v1362 = vmul.f32 %v1347, 1.442695
        %v1363 = vpow.pop %v1362
        %v1364 = vsub.f32 %v1180, %v1318
        %v1365 = vsub.f32 %v1199, %v1321
        %v1366 = vsub.f32 %v1218, %v1324
        %v1367 = vsub.f32 %v1237, %v1327
        %v1368 = vsub.f32 %v1256, %v1330
        %v1369 = vsub.f32 %v1275, %v1333
        %v1370 = vsub.f32 %v1294, %v1336
        %v1371 = vsub.f32 %v1313, %v1339
        %v1372 = vmul.f32 %v1364, 1.442695
        %v1373 = vpow.pop %v1372
        %v1374 = vmul.f32 %v1365, 1.442695
        %v1375 = vpow.pop %v1374
        %v1376 = vmul.f32 %v1366, 1.442695
        %v1377 = vpow.pop %v1376
        %v1378 = vmul.f32 %v1367, 1.442695
        %v1379 = vpow.pop %v1378
        %v1380 = vmul.f32 %v1368, 1.442695
        %v1381 = vpow.pop %v1380
        %v1382 = vmul.f32 %v1369, 1.442695
        %v1383 = vpow.pop %v1382
        %v1384 = vmul.f32 %v1370, 1.442695
        %v1385 = vpow.pop %v1384
        %v1386 = vmul.f32 %v1371, 1.442695
        %v1387 = vpow.pop %v1386
        %v1388 = vmul.f32 %v1349, 0.0
        %v1389 = vmul.f32 %v1351, 0.0
        %v1390 = vmul.f32 %v1353, 0.0
        %v1391 = vmul.f32 %v1355, 0.0
        %v1392 = vmul.f32 %v1357, 0.0
        %v1393 = vmul.f32 %v1359, 0.0
        %v1394 = vmul.f32 %v1361, 0.0
        %v1395 = vmul.f32 %v1363, 0.0
        %v1396 = vsel %vm1163, %v1373, 0.0
        %1397 = vadd.xlane.f32.xlu0 %v1396
        %v1398 = vpop.xlane.xlu0 %1397
        %v1399 = vsel %vm1163, %v1375, 0.0
        %1400 = vadd.xlane.f32.xlu0 %v1399
        %v1401 = vpop.xlane.xlu0 %1400
        %v1402 = vsel %vm1163, %v1377, 0.0
        %1403 = vadd.xlane.f32.xlu0 %v1402
        %v1404 = vpop.xlane.xlu0 %1403
        %v1405 = vsel %vm1163, %v1379, 0.0
        %1406 = vadd.xlane.f32.xlu0 %v1405
        %v1407 = vpop.xlane.xlu0 %1406
        %v1408 = vsel %vm1163, %v1381, 0.0
        %1409 = vadd.xlane.f32.xlu0 %v1408
        %v1410 = vpop.xlane.xlu0 %1409
        %v1411 = vsel %vm1163, %v1383, 0.0
        %1412 = vadd.xlane.f32.xlu0 %v1411
        %v1413 = vpop.xlane.xlu0 %1412
        %v1414 = vsel %vm1163, %v1385, 0.0
        %1415 = vadd.xlane.f32.xlu0 %v1414
        %v1416 = vpop.xlane.xlu0 %1415
        %v1417 = vsel %vm1163, %v1387, 0.0
        %1418 = vadd.xlane.f32.xlu0 %v1417
        %v1419 = vpop.xlane.xlu0 %1418
        %v1420 = vadd.f32 %v1388, %v1398
        %v1421 = vadd.f32 %v1389, %v1401
        %v1422 = vadd.f32 %v1390, %v1404
        %v1423 = vadd.f32 %v1391, %v1407
        %v1424 = vadd.f32 %v1392, %v1410
        %v1425 = vadd.f32 %v1393, %v1413
        %v1426 = vadd.f32 %v1394, %v1416
        %v1427 = vadd.f32 %v1395, %v1419
        %v1428 = vpack.c.bf16 %v1373, %v1373
        %v1429 = vpack.c.bf16 %v1375, %v1375
        %v1430 = vpack.c.bf16 %v1377, %v1377
        %v1431 = vpack.c.bf16 %v1379, %v1379
        %v1432 = vpack.c.bf16 %v1381, %v1381
        %v1433 = vpack.c.bf16 %v1383, %v1383
        %v1434 = vpack.c.bf16 %v1385, %v1385
        %v1435 = vpack.c.bf16 %v1387, %v1387
        %v1437 = vsel %vm1163, %v1428, 0
        %vm1439 = vcmask 1043456
        %v1441 = vsel %vm1439, %v1141, 0
        %1443 = vmatpush.bf16.msra.mxu0 0
        %1444 = vmatpush.bf16.msra.mxu0 0
        %1445 = vmatpush.bf16.msra.mxu0 0
        %1446 = vmatpush.bf16.msra.mxu0 0
        %1447 = vmatpush.bf16.msra.mxu0 0
        %1448 = vmatpush.bf16.msra.mxu0 0
        %1449 = vmatpush.bf16.msra.mxu0 0
        %1450 = vmatpush.bf16.msra.mxu0 %v1441
        %1451 = vmatmul.bf16.gmra.mxu0 %v1437
        %v1452 = vpop.f32.mrf.mxu0
        %v1453 = vadd.f32 0.0, %v1452
        %v1454 = vpop.f32.mrf.mxu0
        %1455 = vdwg.mxu0
        %v1457 = vsel %vm1163, %v1429, 0
        %v1460 = vsel %vm1439, %v1153, 0
        %1462 = vmatpush.bf16.msra.mxu0 0
        %1463 = vmatpush.bf16.msra.mxu0 0
        %1464 = vmatpush.bf16.msra.mxu0 0
        %1465 = vmatpush.bf16.msra.mxu0 0
        %1466 = vmatpush.bf16.msra.mxu0 0
        %1467 = vmatpush.bf16.msra.mxu0 0
        %1468 = vmatpush.bf16.msra.mxu0 0
        %1469 = vmatpush.bf16.msra.mxu0 %v1460
        %1470 = vmatmul.bf16.gmra.mxu0 %v1457
        %v1471 = vpop.f32.mrf.mxu0
        %v1472 = vadd.f32 0.0, %v1471
        %v1473 = vpop.f32.mrf.mxu0
        %1474 = vdwg.mxu0
        %v1476 = vsel %vm1163, %v1430, 0
        %v1479 = vsel %vm1439, %v1144, 0
        %1481 = vmatpush.bf16.msra.mxu0 0
        %1482 = vmatpush.bf16.msra.mxu0 0
        %1483 = vmatpush.bf16.msra.mxu0 0
        %1484 = vmatpush.bf16.msra.mxu0 0
        %1485 = vmatpush.bf16.msra.mxu0 0
        %1486 = vmatpush.bf16.msra.mxu0 0
        %1487 = vmatpush.bf16.msra.mxu0 0
        %1488 = vmatpush.bf16.msra.mxu0 %v1479
        %1489 = vmatmul.bf16.gmra.mxu0 %v1476
        %v1490 = vpop.f32.mrf.mxu0
        %v1491 = vadd.f32 0.0, %v1490
        %v1492 = vpop.f32.mrf.mxu0
        %1493 = vdwg.mxu0
        %v1495 = vsel %vm1163, %v1431, 0
        %v1498 = vsel %vm1439, %v1156, 0
        %1500 = vmatpush.bf16.msra.mxu0 0
        %1501 = vmatpush.bf16.msra.mxu0 0
        %1502 = vmatpush.bf16.msra.mxu0 0
        %1503 = vmatpush.bf16.msra.mxu0 0
        %1504 = vmatpush.bf16.msra.mxu0 0
        %1505 = vmatpush.bf16.msra.mxu0 0
        %1506 = vmatpush.bf16.msra.mxu0 0
        %1507 = vmatpush.bf16.msra.mxu0 %v1498
        %1508 = vmatmul.bf16.gmra.mxu0 %v1495
        %v1509 = vpop.f32.mrf.mxu0
        %v1510 = vadd.f32 0.0, %v1509
        %v1511 = vpop.f32.mrf.mxu0
        %1512 = vdwg.mxu0
        %v1514 = vsel %vm1163, %v1432, 0
        %v1517 = vsel %vm1439, %v1147, 0
        %1519 = vmatpush.bf16.msra.mxu0 0
        %1520 = vmatpush.bf16.msra.mxu0 0
        %1521 = vmatpush.bf16.msra.mxu0 0
        %1522 = vmatpush.bf16.msra.mxu0 0
        %1523 = vmatpush.bf16.msra.mxu0 0
        %1524 = vmatpush.bf16.msra.mxu0 0
        %1525 = vmatpush.bf16.msra.mxu0 0
        %1526 = vmatpush.bf16.msra.mxu0 %v1517
        %1527 = vmatmul.bf16.gmra.mxu0 %v1514
        %v1528 = vpop.f32.mrf.mxu0
        %v1529 = vadd.f32 0.0, %v1528
        %v1530 = vpop.f32.mrf.mxu0
        %1531 = vdwg.mxu0
        %v1533 = vsel %vm1163, %v1433, 0
        %v1536 = vsel %vm1439, %v1159, 0
        %1538 = vmatpush.bf16.msra.mxu0 0
        %1539 = vmatpush.bf16.msra.mxu0 0
        %1540 = vmatpush.bf16.msra.mxu0 0
        %1541 = vmatpush.bf16.msra.mxu0 0
        %1542 = vmatpush.bf16.msra.mxu0 0
        %1543 = vmatpush.bf16.msra.mxu0 0
        %1544 = vmatpush.bf16.msra.mxu0 0
        %1545 = vmatpush.bf16.msra.mxu0 %v1536
        %1546 = vmatmul.bf16.gmra.mxu0 %v1533
        %v1547 = vpop.f32.mrf.mxu0
        %v1548 = vadd.f32 0.0, %v1547
        %v1549 = vpop.f32.mrf.mxu0
        %1550 = vdwg.mxu0
        %v1552 = vsel %vm1163, %v1434, 0
        %v1555 = vsel %vm1439, %v1150, 0
        %1557 = vmatpush.bf16.msra.mxu0 0
        %1558 = vmatpush.bf16.msra.mxu0 0
        %1559 = vmatpush.bf16.msra.mxu0 0
        %1560 = vmatpush.bf16.msra.mxu0 0
        %1561 = vmatpush.bf16.msra.mxu0 0
        %1562 = vmatpush.bf16.msra.mxu0 0
        %1563 = vmatpush.bf16.msra.mxu0 0
        %1564 = vmatpush.bf16.msra.mxu0 %v1555
        %1565 = vmatmul.bf16.gmra.mxu0 %v1552
        %v1566 = vpop.f32.mrf.mxu0
        %v1567 = vadd.f32 0.0, %v1566
        %v1568 = vpop.f32.mrf.mxu0
        %1569 = vdwg.mxu0
        %v1571 = vsel %vm1163, %v1435, 0
        %v1574 = vsel %vm1439, %v1162, 0
        %1576 = vmatpush.bf16.msra.mxu0 0
        %1577 = vmatpush.bf16.msra.mxu0 0
        %1578 = vmatpush.bf16.msra.mxu0 0
        %1579 = vmatpush.bf16.msra.mxu0 0
        %1580 = vmatpush.bf16.msra.mxu0 0
        %1581 = vmatpush.bf16.msra.mxu0 0
        %1582 = vmatpush.bf16.msra.mxu0 0
        %1583 = vmatpush.bf16.msra.mxu0 %v1574
        %1584 = vmatmul.bf16.gmra.mxu0 %v1571
        %v1585 = vpop.f32.mrf.mxu0
        %v1586 = vadd.f32 0.0, %v1585
        %v1587 = vpop.f32.mrf.mxu0
        %1588 = vdwg.mxu0
        %v1589 = vadd.f32 %v1388, %v1453
        %v1590 = vadd.f32 %v1389, %v1472
        %v1591 = vadd.f32 %v1390, %v1491
        %v1592 = vadd.f32 %v1391, %v1510
        %v1593 = vadd.f32 %v1392, %v1529
        %v1594 = vadd.f32 %v1393, %v1548
        %v1595 = vadd.f32 %v1394, %v1567
        %v1596 = vadd.f32 %v1395, %v1586
        %v1597 = vrcp.pop %v1420
        %v1598 = vrcp.pop %v1421
        %v1599 = vrcp.pop %v1422
        %v1600 = vrcp.pop %v1423
        %v1601 = vrcp.pop %v1424
        %v1602 = vrcp.pop %v1425
        %v1603 = vrcp.pop %v1426
        %v1604 = vrcp.pop %v1427
        %v1605 = vmul.f32 %v1589, %v1597
        %v1606 = vmul.f32 %v1590, %v1598
        %v1607 = vmul.f32 %v1591, %v1599
        %v1608 = vmul.f32 %v1592, %v1600
        %v1609 = vmul.f32 %v1593, %v1601
        %v1610 = vmul.f32 %v1594, %v1602
        %v1611 = vmul.f32 %v1595, %v1603
        %v1612 = vmul.f32 %v1596, %v1604
        %v1613 = vrot.slane %v1609, 4
        %vm1614 = vcmask 1047556
        %v1615 = vsel %vm1614, %v1613, %v1605
        %v1616 = vrot.slane %v1605, 4
        %v1617 = vsel %vm1614, %v1609, %v1616
        %v1619 = vunpack.c.l.s4 1983009808
        %v1620 = vunpack.c.0.s8 %v1619
        %v1621 = vperm.slane %v1615, %v1620
        %v1623 = vunpack.c.l.s4 1983009808
        %v1624 = vunpack.c.0.s8 %v1623
        %v1625 = vperm.slane %v1617, %v1624
        %v1626 = vrot.slane %v1611, 4
        %v1627 = vsel %vm1614, %v1626, %v1607
        %v1628 = vrot.slane %v1607, 4
        %v1629 = vsel %vm1614, %v1611, %v1628
        %v1631 = vunpack.c.l.s4 1983009808
        %v1632 = vunpack.c.0.s8 %v1631
        %v1633 = vperm.slane %v1627, %v1632
        %v1635 = vunpack.c.l.s4 1983009808
        %v1636 = vunpack.c.0.s8 %v1635
        %v1637 = vperm.slane %v1629, %v1636
        %v1638 = vrot.slane %v1633, 4
        %v1639 = vsel %vm1614, %v1638, %v1621
        %v1640 = vrot.slane %v1621, 4
        %v1641 = vsel %vm1614, %v1633, %v1640
        %v1643 = vunpack.c.l.s4 1934713408
        %v1644 = vunpack.c.0.s8 %v1643
        %v1645 = vperm.slane %v1639, %v1644
        %v1647 = vunpack.c.l.s4 1934713408
        %v1648 = vunpack.c.0.s8 %v1647
        %v1649 = vperm.slane %v1641, %v1648
        %v1650 = vrot.slane %v1637, 4
        %v1651 = vsel %vm1614, %v1650, %v1625
        %v1652 = vrot.slane %v1625, 4
        %v1653 = vsel %vm1614, %v1637, %v1652
        %v1655 = vunpack.c.l.s4 1934713408
        %v1656 = vunpack.c.0.s8 %v1655
        %v1657 = vperm.slane %v1651, %v1656
        %v1659 = vunpack.c.l.s4 1934713408
        %v1660 = vunpack.c.0.s8 %v1659
        %v1661 = vperm.slane %v1653, %v1660
        %v1662 = vrot.slane %v1645, 4
        %v1663 = vsel %vm1614, 0.0, %v1662
        %v1664 = vrot.slane %v1649, 4
        %v1665 = vsel %vm1614, 0.0, %v1664
        %v1666 = vrot.slane %v1657, 4
        %v1667 = vsel %vm1614, 0.0, %v1666
        %v1668 = vrot.slane %v1661, 4
        %v1669 = vsel %vm1614, 0.0, %v1668
        %v1670 = vrot.slane %v1610, 4
        %v1671 = vsel %vm1614, %v1670, %v1606
        %v1672 = vrot.slane %v1606, 4
        %v1673 = vsel %vm1614, %v1610, %v1672
        %v1675 = vunpack.c.l.s4 1983009808
        %v1676 = vunpack.c.0.s8 %v1675
        %v1677 = vperm.slane %v1671, %v1676
        %v1679 = vunpack.c.l.s4 1983009808
        %v1680 = vunpack.c.0.s8 %v1679
        %v1681 = vperm.slane %v1673, %v1680
        %v1682 = vrot.slane %v1612, 4
        %v1683 = vsel %vm1614, %v1682, %v1608
        %v1684 = vrot.slane %v1608, 4
        %v1685 = vsel %vm1614, %v1612, %v1684
        %v1687 = vunpack.c.l.s4 1983009808
        %v1688 = vunpack.c.0.s8 %v1687
        %v1689 = vperm.slane %v1683, %v1688
        %v1691 = vunpack.c.l.s4 1983009808
        %v1692 = vunpack.c.0.s8 %v1691
        %v1693 = vperm.slane %v1685, %v1692
        %v1694 = vrot.slane %v1689, 4
        %v1695 = vsel %vm1614, %v1694, %v1677
        %v1696 = vrot.slane %v1677, 4
        %v1697 = vsel %vm1614, %v1689, %v1696
        %v1699 = vunpack.c.l.s4 1934713408
        %v1700 = vunpack.c.0.s8 %v1699
        %v1701 = vperm.slane %v1695, %v1700
        %v1703 = vunpack.c.l.s4 1934713408
        %v1704 = vunpack.c.0.s8 %v1703
        %v1705 = vperm.slane %v1697, %v1704
        %v1706 = vrot.slane %v1693, 4
        %v1707 = vsel %vm1614, %v1706, %v1681
        %v1708 = vrot.slane %v1681, 4
        %v1709 = vsel %vm1614, %v1693, %v1708
        %v1711 = vunpack.c.l.s4 1934713408
        %v1712 = vunpack.c.0.s8 %v1711
        %v1713 = vperm.slane %v1707, %v1712
        %v1715 = vunpack.c.l.s4 1934713408
        %v1716 = vunpack.c.0.s8 %v1715
        %v1717 = vperm.slane %v1709, %v1716
        %v1718 = vrot.slane %v1701, 4
        %v1719 = vsel %vm1614, 0.0, %v1718
        %v1720 = vrot.slane %v1705, 4
        %v1721 = vsel %vm1614, 0.0, %v1720
        %v1722 = vrot.slane %v1713, 4
        %v1723 = vsel %vm1614, 0.0, %v1722
        %v1724 = vrot.slane %v1717, 4
        %v1725 = vsel %vm1614, 0.0, %v1724
        %v1726 = vsel %vm1614, %v1664, %v1645
        %v1728 = vunpack.c.l.s4 1983009808
        %v1729 = vunpack.c.0.s8 %v1728
        %v1730 = vperm.slane %v1726, %v1729
        %v1731 = vrot.slane %v1665, 4
        %v1732 = vsel %vm1614, %v1731, %v1663
        %v1734 = vunpack.c.l.s4 1983009808
        %v1735 = vunpack.c.0.s8 %v1734
        %v1736 = vperm.slane %v1732, %v1735
        %v1737 = vsel %vm1614, %v1668, %v1657
        %v1739 = vunpack.c.l.s4 1983009808
        %v1740 = vunpack.c.0.s8 %v1739
        %v1741 = vperm.slane %v1737, %v1740
        %v1742 = vrot.slane %v1669, 4
        %v1743 = vsel %vm1614, %v1742, %v1667
        %v1745 = vunpack.c.l.s4 1983009808
        %v1746 = vunpack.c.0.s8 %v1745
        %v1747 = vperm.slane %v1743, %v1746
        %v1748 = vrot.slane %v1736, 4
        %v1749 = vsel %vm1614, %v1748, %v1730
        %v1750 = vrot.slane %v1730, 4
        %v1751 = vsel %vm1614, %v1736, %v1750
        %v1753 = vunpack.c.l.s4 1934713408
        %v1754 = vunpack.c.0.s8 %v1753
        %v1755 = vperm.slane %v1749, %v1754
        %v1757 = vunpack.c.l.s4 1934713408
        %v1758 = vunpack.c.0.s8 %v1757
        %v1759 = vperm.slane %v1751, %v1758
        %v1760 = vrot.slane %v1747, 4
        %v1761 = vsel %vm1614, %v1760, %v1741
        %v1762 = vrot.slane %v1741, 4
        %v1763 = vsel %vm1614, %v1747, %v1762
        %v1765 = vunpack.c.l.s4 1934713408
        %v1766 = vunpack.c.0.s8 %v1765
        %v1767 = vperm.slane %v1761, %v1766
        %v1769 = vunpack.c.l.s4 1934713408
        %v1770 = vunpack.c.0.s8 %v1769
        %v1771 = vperm.slane %v1763, %v1770
        %v1772 = vrot.slane %v1767, 4
        %v1773 = vsel %vm1614, %v1772, %v1755
        %v1774 = vrot.slane %v1755, 4
        %v1775 = vsel %vm1614, %v1767, %v1774
        %v1776 = vrot.slane %v1771, 4
        %v1777 = vsel %vm1614, %v1776, %v1759
        %v1778 = vrot.slane %v1759, 4
        %v1779 = vsel %vm1614, %v1771, %v1778
        %v1780 = vsel %vm1614, %v1720, %v1701
        %v1782 = vunpack.c.l.s4 1983009808
        %v1783 = vunpack.c.0.s8 %v1782
        %v1784 = vperm.slane %v1780, %v1783
        %v1785 = vrot.slane %v1721, 4
        %v1786 = vsel %vm1614, %v1785, %v1719
        %v1788 = vunpack.c.l.s4 1983009808
        %v1789 = vunpack.c.0.s8 %v1788
        %v1790 = vperm.slane %v1786, %v1789
        %v1791 = vsel %vm1614, %v1724, %v1713
        %v1793 = vunpack.c.l.s4 1983009808
        %v1794 = vunpack.c.0.s8 %v1793
        %v1795 = vperm.slane %v1791, %v1794
        %v1796 = vrot.slane %v1725, 4
        %v1797 = vsel %vm1614, %v1796, %v1723
        %v1799 = vunpack.c.l.s4 1983009808
        %v1800 = vunpack.c.0.s8 %v1799
        %v1801 = vperm.slane %v1797, %v1800
        %v1802 = vrot.slane %v1790, 4
        %v1803 = vsel %vm1614, %v1802, %v1784
        %v1804 = vrot.slane %v1784, 4
        %v1805 = vsel %vm1614, %v1790, %v1804
        %v1807 = vunpack.c.l.s4 1934713408
        %v1808 = vunpack.c.0.s8 %v1807
        %v1809 = vperm.slane %v1803, %v1808
        %v1811 = vunpack.c.l.s4 1934713408
        %v1812 = vunpack.c.0.s8 %v1811
        %v1813 = vperm.slane %v1805, %v1812
        %v1814 = vrot.slane %v1801, 4
        %v1815 = vsel %vm1614, %v1814, %v1795
        %v1816 = vrot.slane %v1795, 4
        %v1817 = vsel %vm1614, %v1801, %v1816
        %v1819 = vunpack.c.l.s4 1934713408
        %v1820 = vunpack.c.0.s8 %v1819
        %v1821 = vperm.slane %v1815, %v1820
        %v1823 = vunpack.c.l.s4 1934713408
        %v1824 = vunpack.c.0.s8 %v1823
        %v1825 = vperm.slane %v1817, %v1824
        %v1826 = vrot.slane %v1821, 4
        %v1827 = vsel %vm1614, %v1826, %v1809
        %v1828 = vrot.slane %v1809, 4
        %v1829 = vsel %vm1614, %v1821, %v1828
        %v1830 = vrot.slane %v1825, 4
        %v1831 = vsel %vm1614, %v1830, %v1813
        %v1832 = vrot.slane %v1813, 4
        %v1833 = vsel %vm1614, %v1825, %v1832
        %1836 = vrot.lane.b32.xlu0 %v1775, 8
        %v1837 = vpop.permute.xlu0 %1836
        %1838 = vrot.lane.b32.xlu0 %v1829, 8
        %v1839 = vpop.permute.xlu0 %1838
        %1844 = vrot.lane.b32.xlu0 %v1777, 16
        %v1845 = vpop.permute.xlu0 %1844
        %1846 = vrot.lane.b32.xlu0 %v1831, 16
        %v1847 = vpop.permute.xlu0 %1846
        %1852 = vrot.lane.b32.xlu0 %v1779, 24
        %v1853 = vpop.permute.xlu0 %1852
        %1854 = vrot.lane.b32.xlu0 %v1833, 24
        %v1855 = vpop.permute.xlu0 %1854
        %v1858 = vsel %vm1163, %v1773, %v1837
        %v1859 = vsel %vm1163, %v1827, %v1839
        %vm1860 = vcmask 130048
        %v1861 = vsel %vm1860, %v1858, %v1845
        %v1862 = vsel %vm1860, %v1859, %v1847
        %vm1863 = vcmask 195584
        %v1864 = vsel %vm1863, %v1861, %v1853
        %v1865 = vsel %vm1863, %v1862, %v1855
        %v1866 = vpack.c.bf16 %v1865, %v1864
        %v1867 = vld [vmem:[%s369] sm:$0xf]
        %v1868 = vld [vmem:[%s369 + $0x4] sm:$0xf]
        %v1869 = vld [vmem:[%s369 + $0x8] sm:$0xf]
        %v1870 = vld [vmem:[%s369 + $0xc] sm:$0xf]
        %v1871 = vperm.slane %v393, 1
        %v1876 = vunpack.c.l.b16 %v1867
        %v1877 = vunpack.c.l.b16 %v1868
        %v1878 = vunpack.c.l.b16 %v1869
        %v1879 = vunpack.c.l.b16 %v1870
        %v1880 = vpack.c.b16 %v1877, %v1876
        %v1881 = vpack.c.b16 %v1879, %v1878
        %v1885 = vsel %vm412, %v1866, 0
        %1887 = vmatpush.bf16.msra.mxu0 0
        %1888 = vmatpush.bf16.msra.mxu0 0
        %1889 = vmatpush.bf16.msra.mxu0 0
        %1890 = vmatpush.bf16.msra.mxu0 0
        %1891 = vmatpush.bf16.msra.mxu0 0
        %1892 = vmatpush.bf16.msra.mxu0 0
        %1893 = vmatpush.bf16.msra.mxu0 %v1881
        %1894 = vmatpush.bf16.msra.mxu0 %v1880
        %1895 = vmatmul.bf16.gmra.mxu0 %v1885
        %v1896 = vpop.f32.mrf.mxu0
        %v1897 = vadd.f32 %v1871, %v1896
        %v1898 = vpop.f32.mrf.mxu0
        %v1899 = vadd.f32 %v1871, %v1898
        %1900 = vdwg.mxu0
        %v1901 = vadd.f32 %v391, %v1897
        %v1902 = vadd.f32 %v392, %v1899
        %v1903 = vsel %vm412, %v1901, 0.0
        %1904 = vadd.xlane.f32.xlu0 %v1903
        %v1905 = vpop.xlane.xlu0 %1904
        %v1906 = vsel %vm412, %v1902, 0.0
        %1907 = vadd.xlane.f32.xlu0 %v1906
        %v1908 = vpop.xlane.xlu0 %1907
        %v1909 = vrcp.pop 32.0
        %v1910 = vmul.f32 32.0, %v1909
        %v1911 = vsub.f32 1.0, %v1910
        %v1912 = vmul.f32 %v1909, %v1911
        %v1913 = vadd.f32 %v1909, %v1912
        %vm1914 = vweird.f32 %v1909
        %v1915 = vsel %vm1914, %v1909, %v1913
        %v1916 = vmul.f32 %v1905, %v1915
        %v1917 = vmul.f32 %v1908, %v1915
        %v1918 = vsub.f32 %v1901, %v1916
        %v1919 = vsub.f32 %v1902, %v1917
        %v1920 = vmul.f32 %v1918, %v1918
        %v1921 = vmul.f32 %v1919, %v1919
        %v1922 = vsel %vm412, %v1920, 0.0
        %1923 = vadd.xlane.f32.xlu0 %v1922
        %v1924 = vpop.xlane.xlu0 %1923
        %v1925 = vsel %vm412, %v1921, 0.0
        %1926 = vadd.xlane.f32.xlu0 %v1925
        %v1927 = vpop.xlane.xlu0 %1926
        %v1928 = vmul.f32 %v1924, %v1915
        %v1929 = vmul.f32 %v1927, %v1915
        %v1930 = vadd.f32 %v1928, 1e-05
        %v1931 = vadd.f32 %v1929, 1e-05
        %v1932 = vrsqrt.pop %v1930
        %v1933 = vmul.f32 %v1932, %v1930
        %v1934 = vmul.f32 %v1933, %v1932
        %v1935 = vmul.f32 0.5, %v1934
        %v1936 = vsub.f32 1.5, %v1935
        %v1937 = vmul.f32 %v1932, %v1936
        %vm1938 = vweird.f32 %v1930
        %vm1939 = vweird.f32 %v1932
        %vm1940 = vmor %vm1938, %vm1939
        %v1941 = vsel %vm1940, %v1932, %v1937
        %v1942 = vrsqrt.pop %v1931
        %v1943 = vmul.f32 %v1942, %v1931
        %v1944 = vmul.f32 %v1943, %v1942
        %v1945 = vmul.f32 0.5, %v1944
        %v1946 = vsub.f32 1.5, %v1945
        %v1947 = vmul.f32 %v1942, %v1946
        %vm1948 = vweird.f32 %v1931
        %vm1949 = vweird.f32 %v1942
        %vm1950 = vmor %vm1948, %vm1949
        %v1951 = vsel %vm1950, %v1942, %v1947
        %v1952 = vmul.f32 %v1918, %v1941
        %v1953 = vmul.f32 %v1919, %v1951
        %v1954 = vperm.slane %v393, 2
        %v1955 = vmul.f32 %v1952, %v1954
        %v1956 = vmul.f32 %v1953, %v1954
        %v1957 = vperm.slane %v393, 3
        %v1958 = vadd.f32 %v1955, %v1957
        %v1959 = vadd.f32 %v1956, %v1957
        %v1960 = vpack.c.bf16 %v1959, %v1958
        %v1961 = vld [vmem:[%s374] sm:$0xf]
        %v1962 = vld [vmem:[%s374 + $0x4] sm:$0xf]
        %v1963 = vld [vmem:[%s374 + $0x8] sm:$0xf]
        %v1964 = vld [vmem:[%s374 + $0xc] sm:$0xf]
        %v1965 = vperm.slane %v393, 4
        %v1970 = vunpack.c.l.b16 %v1961
        %v1971 = vunpack.c.l.b16 %v1962
        %v1972 = vunpack.c.l.b16 %v1963
        %v1973 = vunpack.c.l.b16 %v1964
        %v1974 = vpack.c.b16 %v1971, %v1970
        %v1975 = vpack.c.b16 %v1973, %v1972
        %v1979 = vsel %vm412, %v1960, 0
        %1981 = vmatpush.bf16.msra.mxu0 0
        %1982 = vmatpush.bf16.msra.mxu0 0
        %1983 = vmatpush.bf16.msra.mxu0 0
        %1984 = vmatpush.bf16.msra.mxu0 0
        %1985 = vmatpush.bf16.msra.mxu0 0
        %1986 = vmatpush.bf16.msra.mxu0 0
        %1987 = vmatpush.bf16.msra.mxu0 %v1975
        %1988 = vmatpush.bf16.msra.mxu0 %v1974
        %1989 = vmatmul.bf16.gmra.mxu0 %v1979
        %v1990 = vpop.f32.mrf.mxu0
        %v1991 = vadd.f32 %v1965, %v1990
        %v1992 = vpop.f32.mrf.mxu0
        %v1993 = vadd.f32 %v1965, %v1992
        %1994 = vdwg.mxu0
        %v1995 = vmax.f32 %v1991, 0.0
        %v1996 = vmax.f32 %v1993, 0.0
        %v1997 = vpack.c.bf16 %v1996, %v1995
        %v1998 = vld [vmem:[%s379] sm:$0xf]
        %v1999 = vld [vmem:[%s379 + $0x4] sm:$0xf]
        %v2000 = vld [vmem:[%s379 + $0x8] sm:$0xf]
        %v2001 = vld [vmem:[%s379 + $0xc] sm:$0xf]
        %v2002 = vld [vmem:[%s379 + $0x10] sm:$0xf]
        %v2003 = vld [vmem:[%s379 + $0x14] sm:$0xf]
        %v2004 = vld [vmem:[%s379 + $0x18] sm:$0xf]
        %v2005 = vld [vmem:[%s379 + $0x1c] sm:$0xf]
        %v2006 = vperm.slane %v393, 5
        %v2015 = vunpack.c.l.b16 %v1998
        %v2016 = vunpack.c.l.b16 %v1999
        %v2017 = vunpack.c.l.b16 %v2000
        %v2018 = vunpack.c.l.b16 %v2001
        %v2019 = vunpack.c.l.b16 %v2002
        %v2020 = vunpack.c.l.b16 %v2003
        %v2021 = vunpack.c.l.b16 %v2004
        %v2022 = vunpack.c.l.b16 %v2005
        %v2023 = vpack.c.b16 %v2016, %v2015
        %v2024 = vpack.c.b16 %v2018, %v2017
        %v2025 = vpack.c.b16 %v2020, %v2019
        %v2026 = vpack.c.b16 %v2022, %v2021
        %vm2031 = vcmask 523264
        %v2033 = vsel %vm2031, %v1997, 0
        %2035 = vmatpush.bf16.msra.mxu0 0
        %2036 = vmatpush.bf16.msra.mxu0 0
        %2037 = vmatpush.bf16.msra.mxu0 0
        %2038 = vmatpush.bf16.msra.mxu0 0
        %2039 = vmatpush.bf16.msra.mxu0 %v2026
        %2040 = vmatpush.bf16.msra.mxu0 %v2025
        %2041 = vmatpush.bf16.msra.mxu0 %v2024
        %2042 = vmatpush.bf16.msra.mxu0 %v2023
        %2043 = vmatmul.bf16.gmra.mxu0 %v2033
        %v2044 = vpop.f32.mrf.mxu0
        %v2045 = vadd.f32 %v2006, %v2044
        %v2046 = vpop.f32.mrf.mxu0
        %v2047 = vadd.f32 %v2006, %v2046
        %2048 = vdwg.mxu0
        %v2049 = vadd.f32 %v1958, %v2045
        %v2050 = vadd.f32 %v1959, %v2047
        %v2051 = vsel %vm412, %v2049, 0.0
        %2052 = vadd.xlane.f32.xlu0 %v2051
        %v2053 = vpop.xlane.xlu0 %2052
        %v2054 = vsel %vm412, %v2050, 0.0
        %2055 = vadd.xlane.f32.xlu0 %v2054
        %v2056 = vpop.xlane.xlu0 %2055
        %v2057 = vmul.f32 %v2053, %v1915
        %v2058 = vmul.f32 %v2056, %v1915
        %v2059 = vsub.f32 %v2049, %v2057
        %v2060 = vsub.f32 %v2050, %v2058
        %v2061 = vmul.f32 %v2059, %v2059
        %v2062 = vmul.f32 %v2060, %v2060
        %v2063 = vsel %vm412, %v2061, 0.0
        %2064 = vadd.xlane.f32.xlu0 %v2063
        %v2065 = vpop.xlane.xlu0 %2064
        %v2066 = vsel %vm412, %v2062, 0.0
        %2067 = vadd.xlane.f32.xlu0 %v2066
        %v2068 = vpop.xlane.xlu0 %2067
        %v2069 = vmul.f32 %v2065, %v1915
        %v2070 = vmul.f32 %v2068, %v1915
        %v2071 = vadd.f32 %v2069, 1e-05
        %v2072 = vadd.f32 %v2070, 1e-05
        %v2073 = vrsqrt.pop %v2071
        %v2074 = vmul.f32 %v2073, %v2071
        %v2075 = vmul.f32 %v2074, %v2073
        %v2076 = vmul.f32 0.5, %v2075
        %v2077 = vsub.f32 1.5, %v2076
        %v2078 = vmul.f32 %v2073, %v2077
        %vm2079 = vweird.f32 %v2071
        %vm2080 = vweird.f32 %v2073
        %vm2081 = vmor %vm2079, %vm2080
        %v2082 = vsel %vm2081, %v2073, %v2078
        %v2083 = vrsqrt.pop %v2072
        %v2084 = vmul.f32 %v2083, %v2072
        %v2085 = vmul.f32 %v2084, %v2083
        %v2086 = vmul.f32 0.5, %v2085
        %v2087 = vsub.f32 1.5, %v2086
        %v2088 = vmul.f32 %v2083, %v2087
        %vm2089 = vweird.f32 %v2072
        %vm2090 = vweird.f32 %v2083
        %vm2091 = vmor %vm2089, %vm2090
        %v2092 = vsel %vm2091, %v2083, %v2088
        %v2093 = vmul.f32 %v2059, %v2082
        %v2094 = vmul.f32 %v2060, %v2092
        %v2095 = vperm.slane %v393, 6
        %v2096 = vmul.f32 %v2093, %v2095
        %v2097 = vmul.f32 %v2094, %v2095
        %v2098 = vperm.slane %v393, 7
        %v2099 = vadd.f32 %v2096, %v2098
        %v2100 = vadd.f32 %v2097, %v2098
        %p2101 = scmp.lt.s32.totalorder %s27, 1
        // Predicated region
        $region57: #{tpu_custom_call.1} parent=43 // pred_check
          %p2102 = pneg %p2101
        $region58: #{tpu_custom_call.1} parent=43 // pred_check_branch
          %2104 = sbr.rel (%p2102) target = $region60
        $region59: #{tpu_custom_call.1} parent=43 // pred_region
          %2105 = vst.msk [vmem:[#allocation2] sm:$0xff] %vm412, %v2099
          %2106 = vst.msk [vmem:[#allocation2 + $0x8] sm:$0xff] %vm412, %v2100
        $region60: #{tpu_custom_call.1} parent=43 // pred_fallthru
          _
        %p2107 = scmp.eq.s32.totalorder %s27, 1
        // Predicated region
        $region61: #{tpu_custom_call.1} parent=43 // pred_check
          %p2108 = pneg %p2107
        $region62: #{tpu_custom_call.1} parent=43 // pred_check_branch
          %2110 = sbr.rel (%p2108) target = $region64
        $region63: #{tpu_custom_call.1} parent=43 // pred_region
          %2111 = vst.msk [vmem:[#allocation8] sm:$0xff] %vm412, %v2099
          %2112 = vst.msk [vmem:[#allocation8 + $0x8] sm:$0xff] %vm412, %v2100
        $region64: #{tpu_custom_call.1} parent=43 // pred_fallthru
          _
        // Predicated region
        $region65: #{tpu_custom_call.1} parent=43 // pred_check
          %p2113 = pneg %p208
        $region66: #{tpu_custom_call.1} parent=43 // pred_check_branch
          %2115 = sbr.rel (%p2113) target = $region68
        $region67: #{tpu_custom_call.1} parent=43 // pred_region
          %s2116 = smul.u32 2, %s26
          %2118 = vsyncadd [#allocation5], 0
          %s2119 = smul.addr %s2116, 8
          %s2120 = scalar_lea.hbm %s6, %s2119
          %s2121 = sshll.u32 [#allocation8], 4
          %s2122 = int_to_ptr.vmem [resolvable:$true] %s2121
          %s2123 = sshll.u32 %s2120, 4
          %s2124 = int_to_ptr.hbm [resolvable:$true] %s2123
          %2129 = dma.vmem_to_hbm [thread:$0]  %s2122, 256, %s2124, [#allocation5], 128, 128, 8
        $region68: #{tpu_custom_call.1} parent=43 // pred_fallthru
          _
        // Predicated region
        $region69: #{tpu_custom_call.1} parent=43 // pred_check
          %p2130 = pneg %p208
        $region70: #{tpu_custom_call.1} parent=43 // pred_check_branch
          %2132 = sbr.rel (%p2130) target = $region72
        $region71: #{tpu_custom_call.1} parent=43 // pred_region
          %2134 = dma.done [#allocation5], 256
        $region72: #{tpu_custom_call.1} parent=43 // pred_fallthru
          _
      $region44: #{tpu_custom_call.1} parent=5 // pred_fallthru
        _
      %p2135 = scmp.le.s32.totalorder 2, %s17
      // Predicated region
      $region73: #{tpu_custom_call.1} parent=5 // pred_check
        %p2136 = pneg %p2135
      $region74: #{tpu_custom_call.1} parent=5 // pred_check_branch
        %2138 = sbr.rel (%p2136) target = $region76
      $region75: #{tpu_custom_call.1} parent=5 // pred_region
        %s2139 = ssub.s32 %s17, 2
      $region76: #{tpu_custom_call.1} parent=5 // pred_fallthru
        _
    $region6: #{tpu_custom_call.1} parent=1 // loop_footer
      %s21 = sadd.s32 1, %s17
    $region7: #{tpu_custom_call.1} parent=1 // loop_footer_branch
      %16 = sbr.rel target = $region3
    $region8: #{tpu_custom_call.1} parent=1 // loop_exit
      _
    %2140 = vsyncpa [#allocation4], 1
    %s2141 = scalar_lea.sflag [#allocation4], 1
    %2142 = vsyncpa %s2141, 1
    %2143 = vsyncpa [#allocation7], 1
    %s2144 = scalar_lea.sflag [#allocation7], 1
    %2145 = vsyncpa %s2144, 1
    %2146 = vsyncpa [#allocation5], 1
    %s2147 = scalar_lea.sflag [#allocation5], 1
    %2148 = vsyncpa %s2147, 1

</llo_original>
